<compile_context>
chip_gen: v7x
topology: tpu7x:2x2x1
jax: 0.10.0
libtpu: 0.0.40
codegen_flags: <defaults>
</compile_context>

<pallas_src>
import functools

import jax
import jax.numpy as jnp
from jax.experimental import pallas as pl
from jax.experimental.pallas import tpu as pltpu


# bf16 operands / f32 accumulation: biggest MXU-throughput + VMEM/HBM win on all
# generations.  Changes numerics slightly (tolerances loosened in the checks).
USE_BF16_MATMUL = True


# ----------------------------------------------------------------------------
# helpers
# ----------------------------------------------------------------------------
def _round_up(x: int, m: int) -> int:
    return (x + m - 1) // m * m


def _pad2d(a, rows: int, cols: int):
    r, c = a.shape
    if r == rows and c == cols:
        return a
    return jnp.pad(a, ((0, rows - r), (0, cols - c)))


def _tpu_vmem_capacity() -> int:
    try:
        info = pltpu.get_tpu_info()
        cap = getattr(info, "vmem_capacity_bytes", None)
        if cap:
            return int(cap)
    except Exception:
        pass
    return 64 * 1024 * 1024  # conservative (v7x per-TC)


def _vmem_budgets():
    """Returns (vmem_limit_bytes, fused_path_budget_bytes), generation-aware."""
    cap = _tpu_vmem_capacity()
    if cap >= 96 * 1024 * 1024:          # v5e / v6e: 128 MiB physical
        return 96 * 1024 * 1024, 72 * 1024 * 1024
    return 48 * 1024 * 1024, 36 * 1024 * 1024   # v7x: 64 MiB physical


def _pick_tm_fused(M: int) -> int:
    """Row tile for the fused path: >=2 grid steps (megacore), ~8 for large M."""
    m8 = _round_up(max(M, 1), 8)
    if m8 <= 8:
        return 8
    tm = min(512, _round_up((M + 1) // 2, 8))          # at least 2 steps
    if M >= 8 * 128:                                    # aim for >= 8 steps
        tm = min(tm, max(128, _round_up((M + 7) // 8, 8)))
    return max(tm, 8)


def _fused_vmem_estimate(tm, dims_pad, num_layers, weight_bytes):
    # weights/biases single-buffered (pl.Buffered(1)); x/out tiles double-buffered.
    weights = sum(
        dims_pad[i] * dims_pad[i + 1] * weight_bytes + dims_pad[i + 1] * 4
        for i in range(num_layers)
    )
    io = 2 * (tm * dims_pad[0] + tm * dims_pad[-1]) * 4
    inter = sum(tm * d * 4 for d in dims_pad[1:-1])
    return weights + io + inter


# ----------------------------------------------------------------------------
# fused whole-MLP kernel (small models: weights resident in VMEM)
# ----------------------------------------------------------------------------
def _make_fused_kernel(num_layers: int, use_bf16: bool):
    cdt = jnp.bfloat16 if use_bf16 else jnp.float32

    def kernel(*refs):
        # refs = (x_ref, w0, b0, w1, b1, ..., w{L-1}, b{L-1}, o_ref)
        x_ref = refs[0]
        o_ref = refs[-1]
        h = x_ref[...]
        for i in range(num_layers):
            w_ref = refs[1 + 2 * i]
            b_ref = refs[2 + 2 * i]
            h = jnp.dot(h.astype(cdt), w_ref[...],
                        preferred_element_type=jnp.float32)
            h = h + b_ref[...].astype(jnp.float32)     # (1, N) broadcasts over rows
            if i < num_layers - 1:
                h = jnp.maximum(h, 0.0)
        o_ref[...] = h.astype(o_ref.dtype)

    return kernel


def _mlp_fused(x2, params):
    """x2: (M, input_dim) -> (M, output_dim); all layers in one kernel."""
    M, K0 = x2.shape
    num_layers = len(params)
    out_dim = params[-1][0].shape[1]
    vmem_limit, _ = _vmem_budgets()

    # Lane-dense padded feature dims (multiples of 128).
    dims = [K0] + [w.shape[1] for (w, _) in params]
    dims_pad = [_round_up(d, 128) for d in dims]

    tm = _pick_tm_fused(M)
    M_pad = _round_up(M, tm)

    use_bf16 = USE_BF16_MATMUL
    wdt = jnp.bfloat16 if use_bf16 else jnp.float32

    x_p = _pad2d(x2, M_pad, dims_pad[0])
    flat_args = [x_p]
    for li, (w, b) in enumerate(params):
        kp, npad = dims_pad[li], dims_pad[li + 1]
        flat_args.append(_pad2d(w, kp, npad).astype(wdt))
        flat_args.append(_pad2d(b.reshape(1, -1), 1, npad).astype(jnp.float32))

    wbytes = 2 if use_bf16 else 4
    flops = 2 * M_pad * sum(dims_pad[i] * dims_pad[i + 1] for i in range(num_layers))
    w_hbm = sum(dims_pad[i] * dims_pad[i + 1] * wbytes + dims_pad[i + 1] * 4
                for i in range(num_layers))
    cost = pl.CostEstimate(
        flops=int(flops),
        transcendentals=0,
        bytes_accessed=int(M_pad * dims_pad[0] * 4 + M_pad * dims_pad[-1] * 4 + w_hbm),
    )

    def run(weight_mode):
        in_specs = [pl.BlockSpec((tm, dims_pad[0]), lambda i: (i, 0))]
        for li in range(num_layers):
            kp, npad = dims_pad[li], dims_pad[li + 1]
            kwargs = {} if weight_mode is None else {"pipeline_mode": weight_mode}
            in_specs.append(pl.BlockSpec((kp, npad), lambda i: (0, 0), **kwargs))
            in_specs.append(pl.BlockSpec((1, npad), lambda i: (0, 0), **kwargs))
        return pl.pallas_call(
            _make_fused_kernel(num_layers, use_bf16),
            out_shape=jax.ShapeDtypeStruct((M_pad, dims_pad[-1]), x2.dtype),
            grid=(M_pad // tm,),
            in_specs=in_specs,
            out_specs=pl.BlockSpec((tm, dims_pad[-1]), lambda i: (i, 0)),
            compiler_params=pltpu.CompilerParams(
                dimension_semantics=("parallel",),
                vmem_limit_bytes=vmem_limit,
            ),
            cost_estimate=cost,
        )(*flat_args)

    try:
        # Grid-invariant weights/biases: single VMEM copy instead of
        # double-buffering (key on v7x's 64 MiB VMEM).
        out = run(pl.Buffered(buffer_count=1))
    except Exception:
        out = run(None)  # fall back to default pipelining

    if M_pad != M or dims_pad[-1] != out_dim:
        out = out[:M, :out_dim]
    return out


# ----------------------------------------------------------------------------
# tiled single-layer kernel (fallback for large models)
# ----------------------------------------------------------------------------
def _linear_tiled_kernel(x_ref, w_ref, b_ref, o_ref, acc_ref, *,
                         apply_relu: bool, compute_dtype):
    k = pl.program_id(2)

    @pl.when(k == 0)
    def _():
        acc_ref[...] = jnp.zeros_like(acc_ref)

    acc_ref[...] += jnp.dot(
        x_ref[...].astype(compute_dtype), w_ref[...],
        preferred_element_type=jnp.float32,
    )

    @pl.when(k == pl.num_programs(2) - 1)
    def _():
        out = acc_ref[...] + b_ref[...].astype(jnp.float32)
        if apply_relu:
            out = jnp.maximum(out, 0.0)
        o_ref[...] = out.astype(o_ref.dtype)


def _linear_tiled(x, w, b, apply_relu: bool):
    """x: (M, K), w: (K, N), b: (N,) -> (M, N); tiled P1+P3 matmul."""
    M, K = x.shape
    _, N = w.shape
    vmem_limit, _ = _vmem_budgets()

    # Tile selection: big tiles (amortize per-step overhead, raise arithmetic
    # intensity); tn as multiple of 256 to fill the v6e/v7x MXU width.
    N128 = _round_up(N, 128)
    if N128 >= 512:
        tn = 512
    elif N128 >= 256:
        tn = 256
    else:
        tn = N128
    tk = min(1024, _round_up(K, 128))
    tm = min(512, _round_up(M, 8))

    # Megacore: ensure >= 2 parallel grid steps when the problem allows it.
    gi = _round_up(M, tm) // tm
    gj = _round_up(N, tn) // tn
    if gi * gj < 2 and _round_up(M, 8) > 8:
        tm = max(8, _round_up((M + 1) // 2, 8))

    M_pad = _round_up(M, tm)
    N_pad = _round_up(N, tn)
    K_pad = _round_up(K, tk)

    cdt = jnp.bfloat16 if USE_BF16_MATMUL else jnp.float32
    x_p = _pad2d(x, M_pad, K_pad)                    # activation stays f32; cast in-kernel
    w_p = _pad2d(w, K_pad, N_pad).astype(cdt)        # weights cast once here
    b_p = _pad2d(b.reshape(1, -1), 1, N_pad).astype(jnp.float32)

    cost = pl.CostEstimate(
        flops=int(2 * M_pad * N_pad * K_pad),
        transcendentals=0,
        bytes_accessed=int(
            M_pad * K_pad * 4 * (N_pad // tn)
            + K_pad * N_pad * (2 if USE_BF16_MATMUL else 4) * (M_pad // tm)
            + M_pad * N_pad * 4 + N_pad * 4
        ),
    )

    kernel = functools.partial(
        _linear_tiled_kernel, apply_relu=apply_relu, compute_dtype=cdt)
    out = pl.pallas_call(
        kernel,
        out_shape=jax.ShapeDtypeStruct((M_pad, N_pad), x.dtype),
        grid=(M_pad // tm, N_pad // tn, K_pad // tk),
        in_specs=[
            pl.BlockSpec((tm, tk), lambda i, j, k: (i, k)),
            pl.BlockSpec((tk, tn), lambda i, j, k: (k, j)),
            pl.BlockSpec((1, tn), lambda i, j, k: (0, j)),
        ],
        out_specs=pl.BlockSpec((tm, tn), lambda i, j, k: (i, j)),
        scratch_shapes=[pltpu.VMEM((tm, tn), jnp.float32)],
        compiler_params=pltpu.CompilerParams(
            dimension_semantics=("parallel", "parallel", "arbitrary"),
            vmem_limit_bytes=vmem_limit,
        ),
        cost_estimate=cost,
    )(x_p, w_p, b_p)

    if M_pad != M or N_pad != N:
        out = out[:M, :N]
    return out


# ----------------------------------------------------------------------------
# parameters & forward
# ----------------------------------------------------------------------------
def init_mlp_params(key, input_dim, hidden_dim, output_dim, num_layers):
    """Mirrors nn.Linear default init (uniform +-1/sqrt(fan_in)).

    Weights stored as (in_features, out_features)."""
    h = [hidden_dim] * (num_layers - 1)
    dims_in = [input_dim] + h
    dims_out = h + [output_dim]
    params = []
    for n_in, n_out in zip(dims_in, dims_out):
        key, kw, kb = jax.random.split(key, 3)
        bound = 1.0 / jnp.sqrt(jnp.float32(n_in))
        w = jax.random.uniform(kw, (n_in, n_out), jnp.float32, -bound, bound)
        b = jax.random.uniform(kb, (n_out,), jnp.float32, -bound, bound)
        params.append((w, b))
    return params


def mlp_forward(x, params):
    """x: (..., input_dim) -> (..., output_dim), matching the PyTorch MLP."""
    orig_shape = x.shape
    in_dim = orig_shape[-1]
    x2 = x.reshape(-1, in_dim)
    M = x2.shape[0]
    num_layers = len(params)

    _, fused_budget = _vmem_budgets()
    dims_pad = [_round_up(in_dim, 128)] + [
        _round_up(w.shape[1], 128) for (w, _) in params
    ]
    tm = _pick_tm_fused(M)
    wbytes = 2 if USE_BF16_MATMUL else 4
    if _fused_vmem_estimate(tm, dims_pad, num_layers, wbytes) <= fused_budget:
        out2 = _mlp_fused(x2, params)
    else:
        # TODO(synk): fuse consecutive layers here (activation block resident in
        # VMEM, stream weights via pltpu.emit_pipeline) to avoid per-layer HBM
        # round trips of intermediate activations.
        out2 = x2
        for i, (w, b) in enumerate(params):
            out2 = _linear_tiled(out2, w, b, apply_relu=(i < num_layers - 1))

    return out2.reshape(orig_shape[:-1] + (out2.shape[-1],))


def mlp_reference(x, params):
    num_layers = len(params)
    for i, (w, b) in enumerate(params):
        x = x @ w + b
        if i < num_layers - 1:
            x = jnp.maximum(x, 0.0)
    return x


if __name__ == "__main__":
    key = jax.random.PRNGKey(0)
    k_x, k_p = jax.random.split(key)

    # Small shapes: batch=2, seq=8, input_dim=32, hidden_dim=64, output_dim=16
    batch, seq = 2, 8
    input_dim, hidden_dim, output_dim, num_layers = 32, 64, 16, 3

    x = jax.random.normal(k_x, (batch, seq, input_dim), dtype=jnp.float32)
    params = init_mlp_params(k_p, input_dim, hidden_dim, output_dim, num_layers)

    out = jax.block_until_ready(mlp_forward(x, params))
    ref = mlp_reference(x, params)

    tol = 3e-2 if USE_BF16_MATMUL else 1e-5
    assert out.shape == (batch, seq, output_dim), out.shape
    assert jnp.allclose(out, ref, atol=tol, rtol=tol), "fused mismatch vs reference"

    # Exercise the tiled fallback path explicitly on a slightly larger problem
    # so both code paths compile and agree with the reference.
    k2x, k2p = jax.random.split(jax.random.PRNGKey(1))
    x_big = jax.random.normal(k2x, (4, 96, 160), dtype=jnp.float32)
    params_big = init_mlp_params(k2p, 160, 320, 96, 3)
    h = x_big.reshape(-1, 160)
    for i, (w, b) in enumerate(params_big):
        h = _linear_tiled(h, w, b, apply_relu=(i < len(params_big) - 1))
    out_big = jax.block_until_ready(h)
    ref_big = mlp_reference(x_big.reshape(-1, 160), params_big)
    tol_big = 3e-2 if USE_BF16_MATMUL else 1e-4
    assert jnp.allclose(out_big, ref_big, atol=tol_big, rtol=tol_big), "tiled mismatch"

    print("KERNEL_OK")
</pallas_src>

<mosaic_0001>
module attributes {stable_mosaic.version = 11 : i64} {
  func.func @kernel(%arg0: i32, %arg1: memref<8x128xf32, #tpu.memory_space<vmem>>, %arg2: memref<128x128xbf16, #tpu.memory_space<vmem>>, %arg3: memref<1x128xf32, #tpu.memory_space<vmem>>, %arg4: memref<128x128xbf16, #tpu.memory_space<vmem>>, %arg5: memref<1x128xf32, #tpu.memory_space<vmem>>, %arg6: memref<128x128xbf16, #tpu.memory_space<vmem>>, %arg7: memref<1x128xf32, #tpu.memory_space<vmem>>, %arg8: memref<8x128xf32, #tpu.memory_space<vmem>>) attributes {dimension_semantics = [#tpu.dimension_semantics<parallel>], iteration_bounds = array<i64: 2>, scalar_prefetch = 0 : i64, scratch_operands = 0 : i64, tpu.core_type = #tpu.core_type<tc>, window_params = [{transform_indices = @transform_0, window_bounds = array<i64: 8, 128>}, {pipeline_mode = #tpu.pipeline_mode<synchronous>, transform_indices = @transform_1, window_bounds = array<i64: 128, 128>}, {pipeline_mode = #tpu.pipeline_mode<synchronous>, transform_indices = @transform_2, window_bounds = array<i64: 1, 128>}, {pipeline_mode = #tpu.pipeline_mode<synchronous>, transform_indices = @transform_3, window_bounds = array<i64: 128, 128>}, {pipeline_mode = #tpu.pipeline_mode<synchronous>, transform_indices = @transform_4, window_bounds = array<i64: 1, 128>}, {pipeline_mode = #tpu.pipeline_mode<synchronous>, transform_indices = @transform_5, window_bounds = array<i64: 128, 128>}, {pipeline_mode = #tpu.pipeline_mode<synchronous>, transform_indices = @transform_6, window_bounds = array<i64: 1, 128>}, {transform_indices = @transform_7, window_bounds = array<i64: 8, 128>}]} {
    %c0 = arith.constant 0 : index
    %c0_0 = arith.constant 0 : index
    %0 = vector.load %arg1[%c0, %c0_0] : memref<8x128xf32, #tpu.memory_space<vmem>>, vector<8x128xf32>
    %1 = arith.truncf %0 : vector<8x128xf32> to vector<8x128xbf16>
    %c0_1 = arith.constant 0 : index
    %c0_2 = arith.constant 0 : index
    %2 = vector.load %arg2[%c0_1, %c0_2] : memref<128x128xbf16, #tpu.memory_space<vmem>>, vector<128x128xbf16>
    %cst = arith.constant dense<0.000000e+00> : vector<8x128xf32>
    %3 = tpu.matmul %1, %2, %cst {dimension_numbers = #tpu.dot_dimension_numbers<[1], [0], [0], [1], [0, 0, 1, 1], [], []>} : vector<8x128xbf16>, vector<128x128xbf16>, vector<8x128xf32> -> vector<8x128xf32>
    %c0_3 = arith.constant 0 : index
    %c0_4 = arith.constant 0 : index
    %4 = vector.load %arg3[%c0_3, %c0_4] : memref<1x128xf32, #tpu.memory_space<vmem>>, vector<1x128xf32>
    %5 = vector.broadcast %4 : vector<1x128xf32> to vector<8x128xf32>
    %6 = arith.addf %3, %5 : vector<8x128xf32>
    %cst_5 = arith.constant 0.000000e+00 : f32
    %7 = vector.broadcast %cst_5 : f32 to vector<8x128xf32>
    %8 = arith.maximumf %6, %7 : vector<8x128xf32>
    %9 = arith.truncf %8 : vector<8x128xf32> to vector<8x128xbf16>
    %c0_6 = arith.constant 0 : index
    %c0_7 = arith.constant 0 : index
    %10 = vector.load %arg4[%c0_6, %c0_7] : memref<128x128xbf16, #tpu.memory_space<vmem>>, vector<128x128xbf16>
    %cst_8 = arith.constant dense<0.000000e+00> : vector<8x128xf32>
    %11 = tpu.matmul %9, %10, %cst_8 {dimension_numbers = #tpu.dot_dimension_numbers<[1], [0], [0], [1], [0, 0, 1, 1], [], []>} : vector<8x128xbf16>, vector<128x128xbf16>, vector<8x128xf32> -> vector<8x128xf32>
    %c0_9 = arith.constant 0 : index
    %c0_10 = arith.constant 0 : index
    %12 = vector.load %arg5[%c0_9, %c0_10] : memref<1x128xf32, #tpu.memory_space<vmem>>, vector<1x128xf32>
    %13 = vector.broadcast %12 : vector<1x128xf32> to vector<8x128xf32>
    %14 = arith.addf %11, %13 : vector<8x128xf32>
    %cst_11 = arith.constant 0.000000e+00 : f32
    %15 = vector.broadcast %cst_11 : f32 to vector<8x128xf32>
    %16 = arith.maximumf %14, %15 : vector<8x128xf32>
    %17 = arith.truncf %16 : vector<8x128xf32> to vector<8x128xbf16>
    %c0_12 = arith.constant 0 : index
    %c0_13 = arith.constant 0 : index
    %18 = vector.load %arg6[%c0_12, %c0_13] : memref<128x128xbf16, #tpu.memory_space<vmem>>, vector<128x128xbf16>
    %cst_14 = arith.constant dense<0.000000e+00> : vector<8x128xf32>
    %19 = tpu.matmul %17, %18, %cst_14 {dimension_numbers = #tpu.dot_dimension_numbers<[1], [0], [0], [1], [0, 0, 1, 1], [], []>} : vector<8x128xbf16>, vector<128x128xbf16>, vector<8x128xf32> -> vector<8x128xf32>
    %c0_15 = arith.constant 0 : index
    %c0_16 = arith.constant 0 : index
    %20 = vector.load %arg7[%c0_15, %c0_16] : memref<1x128xf32, #tpu.memory_space<vmem>>, vector<1x128xf32>
    %21 = vector.broadcast %20 : vector<1x128xf32> to vector<8x128xf32>
    %22 = arith.addf %19, %21 : vector<8x128xf32>
    %c0_17 = arith.constant 0 : index
    %c0_18 = arith.constant 0 : index
    %23 = vector.load %arg8[%c0_17, %c0_18] : memref<8x128xf32, #tpu.memory_space<vmem>>, vector<8x128xf32>
    tpu.vector_store %arg8[%c0_17, %c0_18], %22 {strides = array<i32>} : memref<8x128xf32, #tpu.memory_space<vmem>>, vector<8x128xf32>,
    return
  }
  func.func @transform_0(%arg0: i32) -> (i32, i32) {
    %c0_i32 = arith.constant 0 : i32
    %c0_i32_0 = arith.constant 0 : i32
    return %arg0, %c0_i32 : i32, i32
  }
  func.func @transform_1(%arg0: i32) -> (i32, i32) {
    %c0_i32 = arith.constant 0 : i32
    %c0_i32_0 = arith.constant 0 : i32
    %c0_i32_1 = arith.constant 0 : i32
    return %c0_i32, %c0_i32_0 : i32, i32
  }
  func.func @transform_2(%arg0: i32) -> (i32, i32) {
    %c0_i32 = arith.constant 0 : i32
    %c0_i32_0 = arith.constant 0 : i32
    %c0_i32_1 = arith.constant 0 : i32
    return %c0_i32, %c0_i32_0 : i32, i32
  }
  func.func @transform_3(%arg0: i32) -> (i32, i32) {
    %c0_i32 = arith.constant 0 : i32
    %c0_i32_0 = arith.constant 0 : i32
    %c0_i32_1 = arith.constant 0 : i32
    return %c0_i32, %c0_i32_0 : i32, i32
  }
  func.func @transform_4(%arg0: i32) -> (i32, i32) {
    %c0_i32 = arith.constant 0 : i32
    %c0_i32_0 = arith.constant 0 : i32
    %c0_i32_1 = arith.constant 0 : i32
    return %c0_i32, %c0_i32_0 : i32, i32
  }
  func.func @transform_5(%arg0: i32) -> (i32, i32) {
    %c0_i32 = arith.constant 0 : i32
    %c0_i32_0 = arith.constant 0 : i32
    %c0_i32_1 = arith.constant 0 : i32
    return %c0_i32, %c0_i32_0 : i32, i32
  }
  func.func @transform_6(%arg0: i32) -> (i32, i32) {
    %c0_i32 = arith.constant 0 : i32
    %c0_i32_0 = arith.constant 0 : i32
    %c0_i32_1 = arith.constant 0 : i32
    return %c0_i32, %c0_i32_0 : i32, i32
  }
  func.func @transform_7(%arg0: i32) -> (i32, i32) {
    %c0_i32 = arith.constant 0 : i32
    %c0_i32_0 = arith.constant 0 : i32
    return %arg0, %c0_i32 : i32, i32
  }
}

module attributes {stable_mosaic.version = 11 : i64} {
  func.func @kernel(%arg0: i32, %arg1: memref<8x128xf32, #tpu.memory_space<vmem>>, %arg2: memref<128x128xbf16, #tpu.memory_space<vmem>>, %arg3: memref<1x128xf32, #tpu.memory_space<vmem>>, %arg4: memref<128x128xbf16, #tpu.memory_space<vmem>>, %arg5: memref<1x128xf32, #tpu.memory_space<vmem>>, %arg6: memref<128x128xbf16, #tpu.memory_space<vmem>>, %arg7: memref<1x128xf32, #tpu.memory_space<vmem>>, %arg8: memref<8x128xf32, #tpu.memory_space<vmem>>) attributes {dimension_semantics = [#tpu.dimension_semantics<parallel>], iteration_bounds = array<i64: 2>, scalar_prefetch = 0 : i64, scratch_operands = 0 : i64, tpu.core_type = #tpu.core_type<tc>, window_params = [{transform_indices = @transform_0, window_bounds = array<i64: 8, 128>}, {pipeline_mode = #tpu.pipeline_mode<synchronous>, transform_indices = @transform_1, window_bounds = array<i64: 128, 128>}, {pipeline_mode = #tpu.pipeline_mode<synchronous>, transform_indices = @transform_2, window_bounds = array<i64: 1, 128>}, {pipeline_mode = #tpu.pipeline_mode<synchronous>, transform_indices = @transform_3, window_bounds = array<i64: 128, 128>}, {pipeline_mode = #tpu.pipeline_mode<synchronous>, transform_indices = @transform_4, window_bounds = array<i64: 1, 128>}, {pipeline_mode = #tpu.pipeline_mode<synchronous>, transform_indices = @transform_5, window_bounds = array<i64: 128, 128>}, {pipeline_mode = #tpu.pipeline_mode<synchronous>, transform_indices = @transform_6, window_bounds = array<i64: 1, 128>}, {transform_indices = @transform_7, window_bounds = array<i64: 8, 128>}]} {
    %c0 = arith.constant 0 : index
    %c0_0 = arith.constant 0 : index
    %0 = vector.load %arg1[%c0, %c0_0] : memref<8x128xf32, #tpu.memory_space<vmem>>, vector<8x128xf32>
    %1 = arith.truncf %0 : vector<8x128xf32> to vector<8x128xbf16>
    %c0_1 = arith.constant 0 : index
    %c0_2 = arith.constant 0 : index
    %2 = vector.load %arg2[%c0_1, %c0_2] : memref<128x128xbf16, #tpu.memory_space<vmem>>, vector<128x128xbf16>
    %cst = arith.constant dense<0.000000e+00> : vector<8x128xf32>
    %3 = tpu.matmul %1, %2, %cst {dimension_numbers = #tpu.dot_dimension_numbers<[1], [0], [0], [1], [0, 0, 1, 1], [], []>} : vector<8x128xbf16>, vector<128x128xbf16>, vector<8x128xf32> -> vector<8x128xf32>
    %c0_3 = arith.constant 0 : index
    %c0_4 = arith.constant 0 : index
    %4 = vector.load %arg3[%c0_3, %c0_4] : memref<1x128xf32, #tpu.memory_space<vmem>>, vector<1x128xf32>
    %5 = vector.broadcast %4 : vector<1x128xf32> to vector<8x128xf32>
    %6 = arith.addf %3, %5 : vector<8x128xf32>
    %cst_5 = arith.constant 0.000000e+00 : f32
    %7 = vector.broadcast %cst_5 : f32 to vector<8x128xf32>
    %8 = arith.maximumf %6, %7 : vector<8x128xf32>
    %9 = arith.truncf %8 : vector<8x128xf32> to vector<8x128xbf16>
    %c0_6 = arith.constant 0 : index
    %c0_7 = arith.constant 0 : index
    %10 = vector.load %arg4[%c0_6, %c0_7] : memref<128x128xbf16, #tpu.memory_space<vmem>>, vector<128x128xbf16>
    %cst_8 = arith.constant dense<0.000000e+00> : vector<8x128xf32>
    %11 = tpu.matmul %9, %10, %cst_8 {dimension_numbers = #tpu.dot_dimension_numbers<[1], [0], [0], [1], [0, 0, 1, 1], [], []>} : vector<8x128xbf16>, vector<128x128xbf16>, vector<8x128xf32> -> vector<8x128xf32>
    %c0_9 = arith.constant 0 : index
    %c0_10 = arith.constant 0 : index
    %12 = vector.load %arg5[%c0_9, %c0_10] : memref<1x128xf32, #tpu.memory_space<vmem>>, vector<1x128xf32>
    %13 = vector.broadcast %12 : vector<1x128xf32> to vector<8x128xf32>
    %14 = arith.addf %11, %13 : vector<8x128xf32>
    %cst_11 = arith.constant 0.000000e+00 : f32
    %15 = vector.broadcast %cst_11 : f32 to vector<8x128xf32>
    %16 = arith.maximumf %14, %15 : vector<8x128xf32>
    %17 = arith.truncf %16 : vector<8x128xf32> to vector<8x128xbf16>
    %c0_12 = arith.constant 0 : index
    %c0_13 = arith.constant 0 : index
    %18 = vector.load %arg6[%c0_12, %c0_13] : memref<128x128xbf16, #tpu.memory_space<vmem>>, vector<128x128xbf16>
    %cst_14 = arith.constant dense<0.000000e+00> : vector<8x128xf32>
    %19 = tpu.matmul %17, %18, %cst_14 {dimension_numbers = #tpu.dot_dimension_numbers<[1], [0], [0], [1], [0, 0, 1, 1], [], []>} : vector<8x128xbf16>, vector<128x128xbf16>, vector<8x128xf32> -> vector<8x128xf32>
    %c0_15 = arith.constant 0 : index
    %c0_16 = arith.constant 0 : index
    %20 = vector.load %arg7[%c0_15, %c0_16] : memref<1x128xf32, #tpu.memory_space<vmem>>, vector<1x128xf32>
    %21 = vector.broadcast %20 : vector<1x128xf32> to vector<8x128xf32>
    %22 = arith.addf %19, %21 : vector<8x128xf32>
    %c0_17 = arith.constant 0 : index
    %c0_18 = arith.constant 0 : index
    %23 = vector.load %arg8[%c0_17, %c0_18] : memref<8x128xf32, #tpu.memory_space<vmem>>, vector<8x128xf32>
    tpu.vector_store %arg8[%c0_17, %c0_18], %22 {strides = array<i32>} : memref<8x128xf32, #tpu.memory_space<vmem>>, vector<8x128xf32>,
    return
  }
  func.func @transform_0(%arg0: i32) -> (i32, i32) {
    %c0_i32 = arith.constant 0 : i32
    %c0_i32_0 = arith.constant 0 : i32
    return %arg0, %c0_i32 : i32, i32
  }
  func.func @transform_1(%arg0: i32) -> (i32, i32) {
    %c0_i32 = arith.constant 0 : i32
    %c0_i32_0 = arith.constant 0 : i32
    %c0_i32_1 = arith.constant 0 : i32
    return %c0_i32, %c0_i32_0 : i32, i32
  }
  func.func @transform_2(%arg0: i32) -> (i32, i32) {
    %c0_i32 = arith.constant 0 : i32
    %c0_i32_0 = arith.constant 0 : i32
    %c0_i32_1 = arith.constant 0 : i32
    return %c0_i32, %c0_i32_0 : i32, i32
  }
  func.func @transform_3(%arg0: i32) -> (i32, i32) {
    %c0_i32 = arith.constant 0 : i32
    %c0_i32_0 = arith.constant 0 : i32
    %c0_i32_1 = arith.constant 0 : i32
    return %c0_i32, %c0_i32_0 : i32, i32
  }
  func.func @transform_4(%arg0: i32) -> (i32, i32) {
    %c0_i32 = arith.constant 0 : i32
    %c0_i32_0 = arith.constant 0 : i32
    %c0_i32_1 = arith.constant 0 : i32
    return %c0_i32, %c0_i32_0 : i32, i32
  }
  func.func @transform_5(%arg0: i32) -> (i32, i32) {
    %c0_i32 = arith.constant 0 : i32
    %c0_i32_0 = arith.constant 0 : i32
    %c0_i32_1 = arith.constant 0 : i32
    return %c0_i32, %c0_i32_0 : i32, i32
  }
  func.func @transform_6(%arg0: i32) -> (i32, i32) {
    %c0_i32 = arith.constant 0 : i32
    %c0_i32_0 = arith.constant 0 : i32
    %c0_i32_1 = arith.constant 0 : i32
    return %c0_i32, %c0_i32_0 : i32, i32
  }
  func.func @transform_7(%arg0: i32) -> (i32, i32) {
    %c0_i32 = arith.constant 0 : i32
    %c0_i32_0 = arith.constant 0 : i32
    return %arg0, %c0_i32 : i32, i32
  }
}

</mosaic_0001>

<llo_original>
// kernel: tpu_custom_call.1
$region0: #{tpu_custom_call.1}
  #allocation0 [shape = 'u32[]', space=smem, size = 0x4, offset = 0x4, fixed_abs, tag = 'smem constant byte address 0x4 - core index']
  #allocation1 [shape = 'u32[144,128]{1,0:T(1,128)}', space=vmem, size = 0x12000, scoped, tag = 'internal scratch']
  %s0 = inlined_call_operand.hbm [shape: f32[16,128], index: 0, kind: input, shape index: {}]
  %s1 = inlined_call_operand.hbm [shape: bf16[128,128], index: 1, kind: input, shape index: {}]
  %s2 = inlined_call_operand.vmem [shape: f32[1,128], index: 2, kind: input, shape index: {}]
  %s3 = inlined_call_operand.hbm [shape: bf16[128,128], index: 3, kind: input, shape index: {}]
  %s4 = inlined_call_operand.vmem [shape: f32[1,128], index: 4, kind: input, shape index: {}]
  %s5 = inlined_call_operand.hbm [shape: bf16[128,128], index: 5, kind: input, shape index: {}]
  %s6 = inlined_call_operand.vmem [shape: f32[1,128], index: 6, kind: input, shape index: {}]
  %s7 = inlined_call_operand.hbm [shape: f32[16,128], index: 7, kind: output, shape index: {}]
  %s8 = sld [smem:[#allocation0]]
  $region77: #{tpu_custom_call.1} parent=0
    _
  %s10 = ssub.s32 1, %s8
  %s11 = scalar_select 0, %s10, %s8
  $region1: #{tpu_custom_call.1} parent=0
    #allocation2 [shape = 'u8[8192]{0}', space=vmem, size = 0x2000, scoped, tag = 'input window, operand 0']
    #allocation3 [shape = 's32[2]{0}', space=sflag, size = 0x8, scoped, tag = 'scoped memory for tpu_custom_call.1']
    #allocation4 [shape = 's32[2]{0}', space=sflag, size = 0x8, scoped, tag = 'scoped memory for tpu_custom_call.1']
    #allocation5 [shape = 'u8[32768]{0}', space=vmem, size = 0x8000, scoped, tag = 'input window, operand 1, single buffered']
    #allocation6 [shape = 's32[1]{0}', space=sflag, size = 0x4, scoped, tag = 'scoped memory for tpu_custom_call.1']
    #allocation7 [shape = 'u8[32768]{0}', space=vmem, size = 0x8000, scoped, tag = 'input window, operand 3, single buffered']
    #allocation8 [shape = 'u8[32768]{0}', space=vmem, size = 0x8000, scoped, tag = 'input window, operand 5, single buffered']
    #allocation9 [shape = 's32[1]{0}', space=sflag, size = 0x4, scoped, tag = 'scoped memory for tpu_custom_call.1']
    #allocation10 [shape = 'u8[8192]{0}', space=vmem, size = 0x2000, scoped, tag = 'output window, operand 0']
    %12 = vsyncpa [#allocation3], 0
    %s13 = scalar_lea.sflag [#allocation3], 1
    %14 = vsyncpa %s13, 0
    %15 = vsyncpa [#allocation6], 0
    %16 = vsyncpa [#allocation9], 0
    %17 = vsyncpa [#allocation4], 0
    %s18 = scalar_lea.sflag [#allocation4], 1
    %19 = vsyncpa %s18, 0
    loop: start=0, step=1, limit=4
    $region2: #{tpu_custom_call.1} parent=1 // loop_pre_header
      _
    $region3: #{tpu_custom_call.1} parent=1 // loop_header
      %s21 = sphi 0, %s25
      %p22 = scmp.ge.s32.totalorder %s21, 4
      %s31 = sphi 0, %s33
      %s34 = sphi 0, %s31
      %s35 = sphi 0, %s34
      %s51 = sphi 0, %s35
      %s55 = sphi 0, %s55
      %s57 = sphi 0, %s55
      %s58 = sphi 0, %s57
      %s72 = sphi 0, %s58
      %s76 = sphi 0, %s76
      %s78 = sphi 0, %s76
      %s79 = sphi 0, %s78
      %s93 = sphi 0, %s79
      %s97 = sphi 0, %s97
      %s99 = sphi 0, %s97
      %s100 = sphi 0, %s99
      %s114 = sphi 0, %s100
      %s118 = sphi 0, %s118
      %s120 = sphi 0, %s118
      %s121 = sphi 0, %s120
      %s135 = sphi 0, %s121
      %s139 = sphi 0, %s139
      %s141 = sphi 0, %s139
      %s142 = sphi 0, %s141
      %s156 = sphi 0, %s142
      %s160 = sphi 0, %s160
      %s162 = sphi 0, %s160
      %s163 = sphi 0, %s162
      %s177 = sphi 0, %s163
      %s183 = sphi 0, %s185
      %s186 = sphi 0, %s183
      %s187 = sphi 0, %s186
      %s203 = sphi 0, %s187
    $region4: #{tpu_custom_call.1} parent=1 // loop_header_branch
      %24 = sbr.rel (%p22) target = $region8
    $region5: #{tpu_custom_call.1} parent=1 // loop_body
      %s26 = ssub.s32 %s21, 1
      %s27 = ssub.s32 %s21, 2
      %s28 = sadd.s32 %s21, 1
      %s29 = ssub.s32 %s21, %s28
      %p30 = scmp.eq.s32.totalorder %s29, 0
      %s32 = sadd.s32 %s31, 1
      %s33 = scalar_select %p30, %s31, %s32
      %p36 = pneg %p30
      %p37 = scmp.eq.s32.totalorder %s21, 1
      %p38 = por %p36, %p37
      %p39 = scmp.ne.s32.totalorder %s31, %s34
      %p40 = scmp.eq.s32.totalorder %s21, 0
      %p41 = por %p39, %p40
      %p42 = scmp.ne.s32.totalorder %s31, %s34
      %p43 = scmp.eq.s32.totalorder %s26, 1
      %p44 = por %p42, %p43
      %p45 = scmp.ne.s32.totalorder %s34, %s35
      %p46 = scmp.eq.s32.totalorder %s26, 0
      %p47 = por %p45, %p46
      %p48 = scmp.ne.s32.totalorder %s34, %s35
      %p49 = scmp.eq.s32.totalorder %s27, 1
      %p50 = por %p48, %p49
      %p52 = scmp.ne.s32.totalorder %s35, %s51
      %p53 = scmp.eq.s32.totalorder %s27, 0
      %p54 = por %p52, %p53
      %s56 = sadd.s32 %s55, 1
      %p59 = scmp.eq.s32.totalorder %s21, 1
      %p60 = scmp.ne.s32.totalorder %s55, %s57
      %p61 = scmp.eq.s32.totalorder %s21, 0
      %p62 = por %p60, %p61
      %p63 = scmp.ne.s32.totalorder %s55, %s57
      %p64 = scmp.eq.s32.totalorder %s26, 1
      %p65 = por %p63, %p64
      %p66 = scmp.ne.s32.totalorder %s57, %s58
      %p67 = scmp.eq.s32.totalorder %s26, 0
      %p68 = por %p66, %p67
      %p69 = scmp.ne.s32.totalorder %s57, %s58
      %p70 = scmp.eq.s32.totalorder %s27, 1
      %p71 = por %p69, %p70
      %p73 = scmp.ne.s32.totalorder %s58, %s72
      %p74 = scmp.eq.s32.totalorder %s27, 0
      %p75 = por %p73, %p74
      %s77 = sadd.s32 %s76, 1
      %p80 = scmp.eq.s32.totalorder %s21, 1
      %p81 = scmp.ne.s32.totalorder %s76, %s78
      %p82 = scmp.eq.s32.totalorder %s21, 0
      %p83 = por %p81, %p82
      %p84 = scmp.ne.s32.totalorder %s76, %s78
      %p85 = scmp.eq.s32.totalorder %s26, 1
      %p86 = por %p84, %p85
      %p87 = scmp.ne.s32.totalorder %s78, %s79
      %p88 = scmp.eq.s32.totalorder %s26, 0
      %p89 = por %p87, %p88
      %p90 = scmp.ne.s32.totalorder %s78, %s79
      %p91 = scmp.eq.s32.totalorder %s27, 1
      %p92 = por %p90, %p91
      %p94 = scmp.ne.s32.totalorder %s79, %s93
      %p95 = scmp.eq.s32.totalorder %s27, 0
      %p96 = por %p94, %p95
      %s98 = sadd.s32 %s97, 1
      %p101 = scmp.eq.s32.totalorder %s21, 1
      %p102 = scmp.ne.s32.totalorder %s97, %s99
      %p103 = scmp.eq.s32.totalorder %s21, 0
      %p104 = por %p102, %p103
      %p105 = scmp.ne.s32.totalorder %s97, %s99
      %p106 = scmp.eq.s32.totalorder %s26, 1
      %p107 = por %p105, %p106
      %p108 = scmp.ne.s32.totalorder %s99, %s100
      %p109 = scmp.eq.s32.totalorder %s26, 0
      %p110 = por %p108, %p109
      %p111 = scmp.ne.s32.totalorder %s99, %s100
      %p112 = scmp.eq.s32.totalorder %s27, 1
      %p113 = por %p111, %p112
      %p115 = scmp.ne.s32.totalorder %s100, %s114
      %p116 = scmp.eq.s32.totalorder %s27, 0
      %p117 = por %p115, %p116
      %s119 = sadd.s32 %s118, 1
      %p122 = scmp.eq.s32.totalorder %s21, 1
      %p123 = scmp.ne.s32.totalorder %s118, %s120
      %p124 = scmp.eq.s32.totalorder %s21, 0
      %p125 = por %p123, %p124
      %p126 = scmp.ne.s32.totalorder %s118, %s120
      %p127 = scmp.eq.s32.totalorder %s26, 1
      %p128 = por %p126, %p127
      %p129 = scmp.ne.s32.totalorder %s120, %s121
      %p130 = scmp.eq.s32.totalorder %s26, 0
      %p131 = por %p129, %p130
      %p132 = scmp.ne.s32.totalorder %s120, %s121
      %p133 = scmp.eq.s32.totalorder %s27, 1
      %p134 = por %p132, %p133
      %p136 = scmp.ne.s32.totalorder %s121, %s135
      %p137 = scmp.eq.s32.totalorder %s27, 0
      %p138 = por %p136, %p137
      %s140 = sadd.s32 %s139, 1
      %p143 = scmp.eq.s32.totalorder %s21, 1
      %p144 = scmp.ne.s32.totalorder %s139, %s141
      %p145 = scmp.eq.s32.totalorder %s21, 0
      %p146 = por %p144, %p145
      %p147 = scmp.ne.s32.totalorder %s139, %s141
      %p148 = scmp.eq.s32.totalorder %s26, 1
      %p149 = por %p147, %p148
      %p150 = scmp.ne.s32.totalorder %s141, %s142
      %p151 = scmp.eq.s32.totalorder %s26, 0
      %p152 = por %p150, %p151
      %p153 = scmp.ne.s32.totalorder %s141, %s142
      %p154 = scmp.eq.s32.totalorder %s27, 1
      %p155 = por %p153, %p154
      %p157 = scmp.ne.s32.totalorder %s142, %s156
      %p158 = scmp.eq.s32.totalorder %s27, 0
      %p159 = por %p157, %p158
      %s161 = sadd.s32 %s160, 1
      %p164 = scmp.eq.s32.totalorder %s21, 1
      %p165 = scmp.ne.s32.totalorder %s160, %s162
      %p166 = scmp.eq.s32.totalorder %s21, 0
      %p167 = por %p165, %p166
      %p168 = scmp.ne.s32.totalorder %s160, %s162
      %p169 = scmp.eq.s32.totalorder %s26, 1
      %p170 = por %p168, %p169
      %p171 = scmp.ne.s32.totalorder %s162, %s163
      %p172 = scmp.eq.s32.totalorder %s26, 0
      %p173 = por %p171, %p172
      %p174 = scmp.ne.s32.totalorder %s162, %s163
      %p175 = scmp.eq.s32.totalorder %s27, 1
      %p176 = por %p174, %p175
      %p178 = scmp.ne.s32.totalorder %s163, %s177
      %p179 = scmp.eq.s32.totalorder %s27, 0
      %p180 = por %p178, %p179
      %s181 = ssub.s32 %s21, %s28
      %p182 = scmp.eq.s32.totalorder %s181, 0
      %s184 = sadd.s32 %s183, 1
      %s185 = scalar_select %p182, %s183, %s184
      %p188 = pneg %p182
      %p189 = scmp.eq.s32.totalorder %s21, 1
      %p190 = por %p188, %p189
      %p191 = scmp.ne.s32.totalorder %s183, %s186
      %p192 = scmp.eq.s32.totalorder %s21, 0
      %p193 = por %p191, %p192
      %p194 = scmp.ne.s32.totalorder %s183, %s186
      %p195 = scmp.eq.s32.totalorder %s26, 1
      %p196 = por %p194, %p195
      %p197 = scmp.ne.s32.totalorder %s186, %s187
      %p198 = scmp.eq.s32.totalorder %s26, 0
      %p199 = por %p197, %p198
      %p200 = scmp.ne.s32.totalorder %s186, %s187
      %p201 = scmp.eq.s32.totalorder %s27, 1
      %p202 = por %p200, %p201
      %p204 = scmp.ne.s32.totalorder %s187, %s203
      %p205 = scmp.eq.s32.totalorder %s27, 0
      %p206 = por %p204, %p205
      %p207 = scmp.le.s32.totalorder 1, %s21
      %p208 = scmp.lt.s32.totalorder %s21, 3
      %p209 = pnand %p207, %p208
      %p210 = pneg %p209
      // Predicated region
      $region9: #{tpu_custom_call.1} parent=5 // pred_check
        _
      $region10: #{tpu_custom_call.1} parent=5 // pred_check_branch
        %212 = sbr.rel (%p209) target = $region12
      $region11: #{tpu_custom_call.1} parent=5 // pred_region
        %s213 = ssub.s32 %s21, 1
        // Predicated region
        $region13: #{tpu_custom_call.1} parent=11 // pred_check
          %p214 = pneg %p68
        $region14: #{tpu_custom_call.1} parent=11 // pred_check_branch
          %216 = sbr.rel (%p214) target = $region16
        $region15: #{tpu_custom_call.1} parent=11 // pred_region
          %s218 = ssub.s32 1024, 1024
          %219 = vsyncadd [#allocation6], %s218
          %s220 = sshll.u32 [#allocation5], 4
          %s221 = int_to_ptr.vmem [resolvable:$true] %s220
          %226 = dma.hbm_to_vmem [thread:$0]  %s1, 1024, %s221, [#allocation6], 64, 64, 4
        $region16: #{tpu_custom_call.1} parent=11 // pred_fallthru
          _
        // Predicated region
        $region17: #{tpu_custom_call.1} parent=11 // pred_check
          %p227 = pneg %p89
        $region18: #{tpu_custom_call.1} parent=11 // pred_check_branch
          %229 = sbr.rel (%p227) target = $region20
        $region19: #{tpu_custom_call.1} parent=11 // pred_region
          _
        $region20: #{tpu_custom_call.1} parent=11 // pred_fallthru
          _
        // Predicated region
        $region21: #{tpu_custom_call.1} parent=11 // pred_check
          %p230 = pneg %p110
        $region22: #{tpu_custom_call.1} parent=11 // pred_check_branch
          %232 = sbr.rel (%p230) target = $region24
        $region23: #{tpu_custom_call.1} parent=11 // pred_region
          %s234 = ssub.s32 1024, 1024
          %235 = vsyncadd [#allocation6], %s234
          %s236 = sshll.u32 [#allocation7], 4
          %s237 = int_to_ptr.vmem [resolvable:$true] %s236
          %242 = dma.hbm_to_vmem [thread:$0]  %s3, 1024, %s237, [#allocation6], 64, 64, 4
        $region24: #{tpu_custom_call.1} parent=11 // pred_fallthru
          _
        // Predicated region
        $region25: #{tpu_custom_call.1} parent=11 // pred_check
          %p243 = pneg %p131
        $region26: #{tpu_custom_call.1} parent=11 // pred_check_branch
          %245 = sbr.rel (%p243) target = $region28
        $region27: #{tpu_custom_call.1} parent=11 // pred_region
          _
        $region28: #{tpu_custom_call.1} parent=11 // pred_fallthru
          _
        // Predicated region
        $region29: #{tpu_custom_call.1} parent=11 // pred_check
          %p246 = pneg %p152
        $region30: #{tpu_custom_call.1} parent=11 // pred_check_branch
          %248 = sbr.rel (%p246) target = $region32
        $region31: #{tpu_custom_call.1} parent=11 // pred_region
          %s250 = ssub.s32 1024, 1024
          %251 = vsyncadd [#allocation9], %s250
          %s252 = sshll.u32 [#allocation8], 4
          %s253 = int_to_ptr.vmem [resolvable:$true] %s252
          %258 = dma.hbm_to_vmem [thread:$0]  %s5, 1024, %s253, [#allocation9], 64, 64, 4
        $region32: #{tpu_custom_call.1} parent=11 // pred_fallthru
          _
        // Predicated region
        $region33: #{tpu_custom_call.1} parent=11 // pred_check
          %p259 = pneg %p173
        $region34: #{tpu_custom_call.1} parent=11 // pred_check_branch
          %261 = sbr.rel (%p259) target = $region36
        $region35: #{tpu_custom_call.1} parent=11 // pred_region
          _
        $region36: #{tpu_custom_call.1} parent=11 // pred_fallthru
          _
      $region12: #{tpu_custom_call.1} parent=5 // pred_fallthru
        _
      %p262 = scmp.lt.s32.totalorder %s21, 2
      // Predicated region
      $region37: #{tpu_custom_call.1} parent=5 // pred_check
        %p263 = pneg %p262
      $region38: #{tpu_custom_call.1} parent=5 // pred_check_branch
        %265 = sbr.rel (%p263) target = $region40
      $region39: #{tpu_custom_call.1} parent=5 // pred_region
        // Predicated region
        $region41: #{tpu_custom_call.1} parent=39 // pred_check
          %p266 = pneg %p41
        $region42: #{tpu_custom_call.1} parent=39 // pred_check_branch
          %268 = sbr.rel (%p266) target = $region44
        $region43: #{tpu_custom_call.1} parent=39 // pred_region
          %s269 = sand.u32 %s31, 1
          %s270 = scalar_lea.sflag [#allocation3], %s269
          %s271 = sand.u32 %s31, 1
          %s272 = smul.addr %s271, 8
          %s273 = scalar_lea.vmem [#allocation2], %s272
          %s275 = ssub.s32 128, 128
          %276 = vsyncadd %s270, %s275
          %s277 = smul.addr %s21, 128
          %s278 = scalar_lea.hbm %s0, %s277
          %s280 = sshll.u32 %s273, 4
          %s281 = int_to_ptr.vmem [resolvable:$true] %s280
          %283 = dma.hbm_to_vmem [thread:$0]  %s278, 128, %s281, %s270
        $region44: #{tpu_custom_call.1} parent=39 // pred_fallthru
          _
      $region40: #{tpu_custom_call.1} parent=5 // pred_fallthru
        _
      %p284 = scmp.le.s32.totalorder 1, %s21
      %p285 = scmp.lt.s32.totalorder %s21, 3
      %p286 = pnand %p284, %p285
      %p287 = pneg %p286
      // Predicated region
      $region45: #{tpu_custom_call.1} parent=5 // pred_check
        _
      $region46: #{tpu_custom_call.1} parent=5 // pred_check_branch
        %289 = sbr.rel (%p286) target = $region48
      $region47: #{tpu_custom_call.1} parent=5 // pred_region
        %s290 = ssub.s32 %s21, 1
        %s291 = sand.u32 %s34, 1
        %s292 = scalar_lea.sflag [#allocation3], %s291
        %s293 = sand.u32 %s34, 1
        %s294 = smul.addr %s293, 8
        %s295 = scalar_lea.vmem [#allocation2], %s294
        // Predicated region
        $region49: #{tpu_custom_call.1} parent=47 // pred_check
          %p296 = pneg %p47
        $region50: #{tpu_custom_call.1} parent=47 // pred_check_branch
          %298 = sbr.rel (%p296) target = $region52
        $region51: #{tpu_custom_call.1} parent=47 // pred_region
          %299 = dma.done %s292, 128
        $region52: #{tpu_custom_call.1} parent=47 // pred_fallthru
          _
        // Predicated region
        $region53: #{tpu_custom_call.1} parent=47 // pred_check
          %p300 = pneg %p68
        $region54: #{tpu_custom_call.1} parent=47 // pred_check_branch
          %302 = sbr.rel (%p300) target = $region56
        $region55: #{tpu_custom_call.1} parent=47 // pred_region
          %303 = dma.done [#allocation6], 1024
        $region56: #{tpu_custom_call.1} parent=47 // pred_fallthru
          _
        // Predicated region
        $region57: #{tpu_custom_call.1} parent=47 // pred_check
          %p304 = pneg %p110
        $region58: #{tpu_custom_call.1} parent=47 // pred_check_branch
          %306 = sbr.rel (%p304) target = $region60
        $region59: #{tpu_custom_call.1} parent=47 // pred_region
          %307 = dma.done [#allocation6], 1024
        $region60: #{tpu_custom_call.1} parent=47 // pred_fallthru
          _
        // Predicated region
        $region61: #{tpu_custom_call.1} parent=47 // pred_check
          %p308 = pneg %p152
        $region62: #{tpu_custom_call.1} parent=47 // pred_check_branch
          %310 = sbr.rel (%p308) target = $region64
        $region63: #{tpu_custom_call.1} parent=47 // pred_region
          %311 = dma.done [#allocation9], 1024
        $region64: #{tpu_custom_call.1} parent=47 // pred_fallthru
          _
        %s312 = sand.u32 %s34, 1
        %s313 = scalar_lea.sflag [#allocation3], %s312
        %s314 = sand.u32 %s34, 1
        %s315 = smul.addr %s314, 8
        %s316 = scalar_lea.vmem [#allocation2], %s315
        %p317 = pneg %p47
        %p318 = pneg %p44
        %p319 = pneg %p68
        %p320 = pneg %p65
        %p321 = pneg %p89
        %p322 = pneg %p86
        %p323 = pneg %p110
        %p324 = pneg %p107
        %p325 = pneg %p131
        %p326 = pneg %p128
        %p327 = pneg %p152
        %p328 = pneg %p149
        %p329 = pneg %p173
        %p330 = pneg %p170
        %p331 = pneg %p199
        %p332 = pneg %p196
        %s333 = sand.u32 %s186, 1
        %s334 = scalar_lea.sflag [#allocation4], %s333
        %s335 = sand.u32 %s186, 1
        %s336 = smul.addr %s335, 8
        %s337 = scalar_lea.vmem [#allocation10], %s336
        %v339 = vld [vmem:[%s295] sm:$0xff]
        %v340 = vpack.c.bf16 %v339, %v339
        %v341 = vld [vmem:[#allocation5] sm:$0xf]
        %v342 = vld [vmem:[#allocation5 + $0x4] sm:$0xf]
        %v343 = vld [vmem:[#allocation5 + $0x8] sm:$0xf]
        %v344 = vld [vmem:[#allocation5 + $0xc] sm:$0xf]
        %v345 = vld [vmem:[#allocation5 + $0x10] sm:$0xf]
        %v346 = vld [vmem:[#allocation5 + $0x14] sm:$0xf]
        %v347 = vld [vmem:[#allocation5 + $0x18] sm:$0xf]
        %v348 = vld [vmem:[#allocation5 + $0x1c] sm:$0xf]
        %v349 = vld [vmem:[#allocation5 + $0x20] sm:$0xf]
        %v350 = vld [vmem:[#allocation5 + $0x24] sm:$0xf]
        %v351 = vld [vmem:[#allocation5 + $0x28] sm:$0xf]
        %v352 = vld [vmem:[#allocation5 + $0x2c] sm:$0xf]
        %v353 = vld [vmem:[#allocation5 + $0x30] sm:$0xf]
        %v354 = vld [vmem:[#allocation5 + $0x34] sm:$0xf]
        %v355 = vld [vmem:[#allocation5 + $0x38] sm:$0xf]
        %v356 = vld [vmem:[#allocation5 + $0x3c] sm:$0xf]
        %v357 = vld [vmem:[%s2] sm:$0x1]
        %v359 = vlaneseq
        %v360 = vshrl.u32 %v359, 7
        %v361 = vsub.s32 0, %v360
        %v362 = vrot.slane %v357, %v361
        %v380 = vunpack.c.l.b16 %v341
        %v381 = vunpack.c.l.b16 %v342
        %v382 = vunpack.c.l.b16 %v343
        %v383 = vunpack.c.l.b16 %v344
        %v384 = vunpack.c.l.b16 %v345
        %v385 = vunpack.c.l.b16 %v346
        %v386 = vunpack.c.l.b16 %v347
        %v387 = vunpack.c.l.b16 %v348
        %v388 = vunpack.c.l.b16 %v349
        %v389 = vunpack.c.l.b16 %v350
        %v390 = vunpack.c.l.b16 %v351
        %v391 = vunpack.c.l.b16 %v352
        %v392 = vunpack.c.l.b16 %v353
        %v393 = vunpack.c.l.b16 %v354
        %v394 = vunpack.c.l.b16 %v355
        %v395 = vunpack.c.l.b16 %v356
        %v396 = vpack.c.b16 %v381, %v380
        %v397 = vpack.c.b16 %v383, %v382
        %v398 = vpack.c.b16 %v385, %v384
        %v399 = vpack.c.b16 %v387, %v386
        %v400 = vpack.c.b16 %v389, %v388
        %v401 = vpack.c.b16 %v391, %v390
        %v402 = vpack.c.b16 %v393, %v392
        %v403 = vpack.c.b16 %v395, %v394
        %412 = vmatprep.subr.bf16.mxu0 0
        %413 = vmatpush1.bf16.msra.mxu0 %v396
        %414 = vmatprep.subr.bf16.mxu0 0
        %415 = vmatpush1.bf16.msra.mxu0 %v397
        %416 = vmatprep.subr.bf16.mxu0 0
        %417 = vmatpush1.bf16.msra.mxu0 %v398
        %418 = vmatprep.subr.bf16.mxu0 0
        %419 = vmatpush1.bf16.msra.mxu0 %v399
        %420 = vmatprep.subr.bf16.mxu0 0
        %421 = vmatpush1.bf16.msra.mxu0 %v400
        %422 = vmatprep.subr.bf16.mxu0 0
        %423 = vmatpush1.bf16.msra.mxu0 %v401
        %424 = vmatprep.subr.bf16.mxu0 0
        %425 = vmatpush1.bf16.msra.mxu0 %v402
        %426 = vmatprep.subr.bf16.mxu0 0
        %427 = vmatpush1.bf16.msra.mxu0 %v403
        %428 = vmatprep.subr.bf16.mxu0 0
        %429 = vmatpush1.bf16.msra.mxu0 0
        %430 = vmatprep.subr.bf16.mxu0 0
        %431 = vmatpush1.bf16.msra.mxu0 0
        %432 = vmatprep.subr.bf16.mxu0 0
        %433 = vmatpush1.bf16.msra.mxu0 0
        %434 = vmatprep.subr.bf16.mxu0 0
        %435 = vmatpush1.bf16.msra.mxu0 0
        %436 = vmatprep.subr.bf16.mxu0 0
        %437 = vmatpush1.bf16.msra.mxu0 0
        %438 = vmatprep.subr.bf16.mxu0 0
        %439 = vmatpush1.bf16.msra.mxu0 0
        %440 = vmatprep.subr.bf16.mxu0 0
        %441 = vmatpush1.bf16.msra.mxu0 0
        %442 = vmatprep.subr.bf16.mxu0 0
        %443 = vmatpush1.bf16.msra.mxu0 0
        %444 = vmatprep.mubr.bf16.mxu0 0
        %445 = vmatmul.mubr.bf16.gmra.mrb[0].mxu0 %v340
        %v446 = vpop.f32.mrb[0].mxu0
        %v447 = vadd.f32 %v362, %v446
        %v448 = vpop.f32.mrb[0].mxu0
        %v449 = vpop.f32.mrb[0].mxu0
        %v450 = vpop.f32.mrb[0].mxu0
        %451 = vdwg.mxu0
        %v452 = vmax.f32 %v447, 0.0
        %v453 = vpack.c.bf16 %v452, %v452
        %v454 = vld [vmem:[#allocation7] sm:$0xf]
        %v455 = vld [vmem:[#allocation7 + $0x4] sm:$0xf]
        %v456 = vld [vmem:[#allocation7 + $0x8] sm:$0xf]
        %v457 = vld [vmem:[#allocation7 + $0xc] sm:$0xf]
        %v458 = vld [vmem:[#allocation7 + $0x10] sm:$0xf]
        %v459 = vld [vmem:[#allocation7 + $0x14] sm:$0xf]
        %v460 = vld [vmem:[#allocation7 + $0x18] sm:$0xf]
        %v461 = vld [vmem:[#allocation7 + $0x1c] sm:$0xf]
        %v462 = vld [vmem:[#allocation7 + $0x20] sm:$0xf]
        %v463 = vld [vmem:[#allocation7 + $0x24] sm:$0xf]
        %v464 = vld [vmem:[#allocation7 + $0x28] sm:$0xf]
        %v465 = vld [vmem:[#allocation7 + $0x2c] sm:$0xf]
        %v466 = vld [vmem:[#allocation7 + $0x30] sm:$0xf]
        %v467 = vld [vmem:[#allocation7 + $0x34] sm:$0xf]
        %v468 = vld [vmem:[#allocation7 + $0x38] sm:$0xf]
        %v469 = vld [vmem:[#allocation7 + $0x3c] sm:$0xf]
        %v470 = vld [vmem:[%s4] sm:$0x1]
        %v472 = vlaneseq
        %v473 = vshrl.u32 %v472, 7
        %v474 = vsub.s32 0, %v473
        %v475 = vrot.slane %v470, %v474
        %v493 = vunpack.c.l.b16 %v454
        %v494 = vunpack.c.l.b16 %v455
        %v495 = vunpack.c.l.b16 %v456
        %v496 = vunpack.c.l.b16 %v457
        %v497 = vunpack.c.l.b16 %v458
        %v498 = vunpack.c.l.b16 %v459
        %v499 = vunpack.c.l.b16 %v460
        %v500 = vunpack.c.l.b16 %v461
        %v501 = vunpack.c.l.b16 %v462
        %v502 = vunpack.c.l.b16 %v463
        %v503 = vunpack.c.l.b16 %v464
        %v504 = vunpack.c.l.b16 %v465
        %v505 = vunpack.c.l.b16 %v466
        %v506 = vunpack.c.l.b16 %v467
        %v507 = vunpack.c.l.b16 %v468
        %v508 = vunpack.c.l.b16 %v469
        %v509 = vpack.c.b16 %v494, %v493
        %v510 = vpack.c.b16 %v496, %v495
        %v511 = vpack.c.b16 %v498, %v497
        %v512 = vpack.c.b16 %v500, %v499
        %v513 = vpack.c.b16 %v502, %v501
        %v514 = vpack.c.b16 %v504, %v503
        %v515 = vpack.c.b16 %v506, %v505
        %v516 = vpack.c.b16 %v508, %v507
        %525 = vmatprep.subr.bf16.mxu0 0
        %526 = vmatpush1.bf16.msra.mxu0 %v509
        %527 = vmatprep.subr.bf16.mxu0 0
        %528 = vmatpush1.bf16.msra.mxu0 %v510
        %529 = vmatprep.subr.bf16.mxu0 0
        %530 = vmatpush1.bf16.msra.mxu0 %v511
        %531 = vmatprep.subr.bf16.mxu0 0
        %532 = vmatpush1.bf16.msra.mxu0 %v512
        %533 = vmatprep.subr.bf16.mxu0 0
        %534 = vmatpush1.bf16.msra.mxu0 %v513
        %535 = vmatprep.subr.bf16.mxu0 0
        %536 = vmatpush1.bf16.msra.mxu0 %v514
        %537 = vmatprep.subr.bf16.mxu0 0
        %538 = vmatpush1.bf16.msra.mxu0 %v515
        %539 = vmatprep.subr.bf16.mxu0 0
        %540 = vmatpush1.bf16.msra.mxu0 %v516
        %541 = vmatprep.subr.bf16.mxu0 0
        %542 = vmatpush1.bf16.msra.mxu0 0
        %543 = vmatprep.subr.bf16.mxu0 0
        %544 = vmatpush1.bf16.msra.mxu0 0
        %545 = vmatprep.subr.bf16.mxu0 0
        %546 = vmatpush1.bf16.msra.mxu0 0
        %547 = vmatprep.subr.bf16.mxu0 0
        %548 = vmatpush1.bf16.msra.mxu0 0
        %549 = vmatprep.subr.bf16.mxu0 0
        %550 = vmatpush1.bf16.msra.mxu0 0
        %551 = vmatprep.subr.bf16.mxu0 0
        %552 = vmatpush1.bf16.msra.mxu0 0
        %553 = vmatprep.subr.bf16.mxu0 0
        %554 = vmatpush1.bf16.msra.mxu0 0
        %555 = vmatprep.subr.bf16.mxu0 0
        %556 = vmatpush1.bf16.msra.mxu0 0
        %557 = vmatprep.mubr.bf16.mxu0 0
        %558 = vmatmul.mubr.bf16.gmra.mrb[0].mxu0 %v453
        %v559 = vpop.f32.mrb[0].mxu0
        %v560 = vadd.f32 %v475, %v559
        %v561 = vpop.f32.mrb[0].mxu0
        %v562 = vpop.f32.mrb[0].mxu0
        %v563 = vpop.f32.mrb[0].mxu0
        %564 = vdwg.mxu0
        %v565 = vmax.f32 %v560, 0.0
        %v566 = vpack.c.bf16 %v565, %v565
        %v567 = vld [vmem:[#allocation8] sm:$0xf]
        %v568 = vld [vmem:[#allocation8 + $0x4] sm:$0xf]
        %v569 = vld [vmem:[#allocation8 + $0x8] sm:$0xf]
        %v570 = vld [vmem:[#allocation8 + $0xc] sm:$0xf]
        %v571 = vld [vmem:[#allocation8 + $0x10] sm:$0xf]
        %v572 = vld [vmem:[#allocation8 + $0x14] sm:$0xf]
        %v573 = vld [vmem:[#allocation8 + $0x18] sm:$0xf]
        %v574 = vld [vmem:[#allocation8 + $0x1c] sm:$0xf]
        %v575 = vld [vmem:[#allocation8 + $0x20] sm:$0xf]
        %v576 = vld [vmem:[#allocation8 + $0x24] sm:$0xf]
        %v577 = vld [vmem:[#allocation8 + $0x28] sm:$0xf]
        %v578 = vld [vmem:[#allocation8 + $0x2c] sm:$0xf]
        %v579 = vld [vmem:[#allocation8 + $0x30] sm:$0xf]
        %v580 = vld [vmem:[#allocation8 + $0x34] sm:$0xf]
        %v581 = vld [vmem:[#allocation8 + $0x38] sm:$0xf]
        %v582 = vld [vmem:[#allocation8 + $0x3c] sm:$0xf]
        %v583 = vld [vmem:[%s6] sm:$0x1]
        %v585 = vlaneseq
        %v586 = vshrl.u32 %v585, 7
        %v587 = vsub.s32 0, %v586
        %v588 = vrot.slane %v583, %v587
        %v606 = vunpack.c.l.b16 %v567
        %v607 = vunpack.c.l.b16 %v568
        %v608 = vunpack.c.l.b16 %v569
        %v609 = vunpack.c.l.b16 %v570
        %v610 = vunpack.c.l.b16 %v571
        %v611 = vunpack.c.l.b16 %v572
        %v612 = vunpack.c.l.b16 %v573
        %v613 = vunpack.c.l.b16 %v574
        %v614 = vunpack.c.l.b16 %v575
        %v615 = vunpack.c.l.b16 %v576
        %v616 = vunpack.c.l.b16 %v577
        %v617 = vunpack.c.l.b16 %v578
        %v618 = vunpack.c.l.b16 %v579
        %v619 = vunpack.c.l.b16 %v580
        %v620 = vunpack.c.l.b16 %v581
        %v621 = vunpack.c.l.b16 %v582
        %v622 = vpack.c.b16 %v607, %v606
        %v623 = vpack.c.b16 %v609, %v608
        %v624 = vpack.c.b16 %v611, %v610
        %v625 = vpack.c.b16 %v613, %v612
        %v626 = vpack.c.b16 %v615, %v614
        %v627 = vpack.c.b16 %v617, %v616
        %v628 = vpack.c.b16 %v619, %v618
        %v629 = vpack.c.b16 %v621, %v620
        %638 = vmatprep.subr.bf16.mxu0 0
        %639 = vmatpush1.bf16.msra.mxu0 %v622
        %640 = vmatprep.subr.bf16.mxu0 0
        %641 = vmatpush1.bf16.msra.mxu0 %v623
        %642 = vmatprep.subr.bf16.mxu0 0
        %643 = vmatpush1.bf16.msra.mxu0 %v624
        %644 = vmatprep.subr.bf16.mxu0 0
        %645 = vmatpush1.bf16.msra.mxu0 %v625
        %646 = vmatprep.subr.bf16.mxu0 0
        %647 = vmatpush1.bf16.msra.mxu0 %v626
        %648 = vmatprep.subr.bf16.mxu0 0
        %649 = vmatpush1.bf16.msra.mxu0 %v627
        %650 = vmatprep.subr.bf16.mxu0 0
        %651 = vmatpush1.bf16.msra.mxu0 %v628
        %652 = vmatprep.subr.bf16.mxu0 0
        %653 = vmatpush1.bf16.msra.mxu0 %v629
        %654 = vmatprep.subr.bf16.mxu0 0
        %655 = vmatpush1.bf16.msra.mxu0 0
        %656 = vmatprep.subr.bf16.mxu0 0
        %657 = vmatpush1.bf16.msra.mxu0 0
        %658 = vmatprep.subr.bf16.mxu0 0
        %659 = vmatpush1.bf16.msra.mxu0 0
        %660 = vmatprep.subr.bf16.mxu0 0
        %661 = vmatpush1.bf16.msra.mxu0 0
        %662 = vmatprep.subr.bf16.mxu0 0
        %663 = vmatpush1.bf16.msra.mxu0 0
        %664 = vmatprep.subr.bf16.mxu0 0
        %665 = vmatpush1.bf16.msra.mxu0 0
        %666 = vmatprep.subr.bf16.mxu0 0
        %667 = vmatpush1.bf16.msra.mxu0 0
        %668 = vmatprep.subr.bf16.mxu0 0
        %669 = vmatpush1.bf16.msra.mxu0 0
        %670 = vmatprep.mubr.bf16.mxu0 0
        %671 = vmatmul.mubr.bf16.gmra.mrb[0].mxu0 %v566
        %v672 = vpop.f32.mrb[0].mxu0
        %v673 = vadd.f32 %v588, %v672
        %v674 = vpop.f32.mrb[0].mxu0
        %v675 = vpop.f32.mrb[0].mxu0
        %v676 = vpop.f32.mrb[0].mxu0
        %677 = vdwg.mxu0
        %678 = vst [vmem:[%s337] sm:$0xff] %v673
        %s679 = sand.u32 %s186, 1
        %s680 = scalar_lea.sflag [#allocation4], %s679
        %s681 = sand.u32 %s186, 1
        %s682 = smul.addr %s681, 8
        %s683 = scalar_lea.vmem [#allocation10], %s682
        // Predicated region
        $region65: #{tpu_custom_call.1} parent=47 // pred_check
          %p684 = pneg %p196
        $region66: #{tpu_custom_call.1} parent=47 // pred_check_branch
          %686 = sbr.rel (%p684) target = $region68
        $region67: #{tpu_custom_call.1} parent=47 // pred_region
          %s688 = ssub.s32 128, 128
          %689 = vsyncadd %s680, %s688
          %s690 = smul.addr %s26, 128
          %s691 = scalar_lea.hbm %s7, %s690
          %s693 = sshll.u32 %s683, 4
          %s694 = int_to_ptr.vmem [resolvable:$true] %s693
          %696 = dma.vmem_to_hbm [thread:$0]  %s694, 128, %s691, %s680
        $region68: #{tpu_custom_call.1} parent=47 // pred_fallthru
          _
      $region48: #{tpu_custom_call.1} parent=5 // pred_fallthru
        _
      %p697 = scmp.le.s32.totalorder 2, %s21
      // Predicated region
      $region69: #{tpu_custom_call.1} parent=5 // pred_check
        %p698 = pneg %p697
      $region70: #{tpu_custom_call.1} parent=5 // pred_check_branch
        %700 = sbr.rel (%p698) target = $region72
      $region71: #{tpu_custom_call.1} parent=5 // pred_region
        %s701 = ssub.s32 %s21, 2
        // Predicated region
        $region73: #{tpu_custom_call.1} parent=71 // pred_check
          %p702 = pneg %p202
        $region74: #{tpu_custom_call.1} parent=71 // pred_check_branch
          %704 = sbr.rel (%p702) target = $region76
        $region75: #{tpu_custom_call.1} parent=71 // pred_region
          %s705 = sand.u32 %s187, 1
          %s706 = scalar_lea.sflag [#allocation4], %s705
          %s707 = sand.u32 %s187, 1
          %s708 = smul.addr %s707, 8
          %s709 = scalar_lea.vmem [#allocation10], %s708
          %710 = dma.done %s706, 128
        $region76: #{tpu_custom_call.1} parent=71 // pred_fallthru
          _
      $region72: #{tpu_custom_call.1} parent=5 // pred_fallthru
        _
    $region6: #{tpu_custom_call.1} parent=1 // loop_footer
      %s25 = sadd.s32 1, %s21
    $region7: #{tpu_custom_call.1} parent=1 // loop_footer_branch
      %20 = sbr.rel target = $region3
    $region8: #{tpu_custom_call.1} parent=1 // loop_exit
      _
    %711 = vsyncpa [#allocation3], 1
    %s712 = scalar_lea.sflag [#allocation3], 1
    %713 = vsyncpa %s712, 1
    %714 = vsyncpa [#allocation6], 1
    %715 = vsyncpa [#allocation9], 1
    %716 = vsyncpa [#allocation4], 1
    %s717 = scalar_lea.sflag [#allocation4], 1
    %718 = vsyncpa %s717, 1

// kernel: tpu_custom_call.1
$region0: #{tpu_custom_call.1}
  #allocation0 [shape = 'u32[]', space=smem, size = 0x4, offset = 0x4, fixed_abs, tag = 'smem constant byte address 0x4 - core index']
  #allocation1 [shape = 'u32[144,128]{1,0:T(1,128)}', space=vmem, size = 0x12000, scoped, tag = 'internal scratch']
  %s0 = inlined_call_operand.hbm [shape: f32[16,128], index: 0, kind: input, shape index: {}]
  %s1 = inlined_call_operand.hbm [shape: bf16[128,128], index: 1, kind: input, shape index: {}]
  %s2 = inlined_call_operand.vmem [shape: f32[1,128], index: 2, kind: input, shape index: {}]
  %s3 = inlined_call_operand.hbm [shape: bf16[128,128], index: 3, kind: input, shape index: {}]
  %s4 = inlined_call_operand.vmem [shape: f32[1,128], index: 4, kind: input, shape index: {}]
  %s5 = inlined_call_operand.hbm [shape: bf16[128,128], index: 5, kind: input, shape index: {}]
  %s6 = inlined_call_operand.vmem [shape: f32[1,128], index: 6, kind: input, shape index: {}]
  %s7 = inlined_call_operand.hbm [shape: f32[16,128], index: 7, kind: output, shape index: {}]
  %s8 = sld [smem:[#allocation0]]
  $region77: #{tpu_custom_call.1} parent=0
    _
  %s10 = ssub.s32 1, %s8
  %s11 = scalar_select 0, %s10, %s8
  $region1: #{tpu_custom_call.1} parent=0
    #allocation2 [shape = 'u8[8192]{0}', space=vmem, size = 0x2000, scoped, tag = 'input window, operand 0']
    #allocation3 [shape = 's32[2]{0}', space=sflag, size = 0x8, scoped, tag = 'scoped memory for tpu_custom_call.1']
    #allocation4 [shape = 's32[2]{0}', space=sflag, size = 0x8, scoped, tag = 'scoped memory for tpu_custom_call.1']
    #allocation5 [shape = 'u8[32768]{0}', space=vmem, size = 0x8000, scoped, tag = 'input window, operand 1, single buffered']
    #allocation6 [shape = 's32[1]{0}', space=sflag, size = 0x4, scoped, tag = 'scoped memory for tpu_custom_call.1']
    #allocation7 [shape = 'u8[32768]{0}', space=vmem, size = 0x8000, scoped, tag = 'input window, operand 3, single buffered']
    #allocation8 [shape = 'u8[32768]{0}', space=vmem, size = 0x8000, scoped, tag = 'input window, operand 5, single buffered']
    #allocation9 [shape = 's32[1]{0}', space=sflag, size = 0x4, scoped, tag = 'scoped memory for tpu_custom_call.1']
    #allocation10 [shape = 'u8[8192]{0}', space=vmem, size = 0x2000, scoped, tag = 'output window, operand 0']
    %12 = vsyncpa [#allocation3], 0
    %s13 = scalar_lea.sflag [#allocation3], 1
    %14 = vsyncpa %s13, 0
    %15 = vsyncpa [#allocation6], 0
    %16 = vsyncpa [#allocation9], 0
    %17 = vsyncpa [#allocation4], 0
    %s18 = scalar_lea.sflag [#allocation4], 1
    %19 = vsyncpa %s18, 0
    loop: start=0, step=1, limit=4
    $region2: #{tpu_custom_call.1} parent=1 // loop_pre_header
      _
    $region3: #{tpu_custom_call.1} parent=1 // loop_header
      %s21 = sphi 0, %s25
      %p22 = scmp.ge.s32.totalorder %s21, 4
      %s31 = sphi 0, %s33
      %s34 = sphi 0, %s31
      %s35 = sphi 0, %s34
      %s51 = sphi 0, %s35
      %s55 = sphi 0, %s55
      %s57 = sphi 0, %s55
      %s58 = sphi 0, %s57
      %s72 = sphi 0, %s58
      %s76 = sphi 0, %s76
      %s78 = sphi 0, %s76
      %s79 = sphi 0, %s78
      %s93 = sphi 0, %s79
      %s97 = sphi 0, %s97
      %s99 = sphi 0, %s97
      %s100 = sphi 0, %s99
      %s114 = sphi 0, %s100
      %s118 = sphi 0, %s118
      %s120 = sphi 0, %s118
      %s121 = sphi 0, %s120
      %s135 = sphi 0, %s121
      %s139 = sphi 0, %s139
      %s141 = sphi 0, %s139
      %s142 = sphi 0, %s141
      %s156 = sphi 0, %s142
      %s160 = sphi 0, %s160
      %s162 = sphi 0, %s160
      %s163 = sphi 0, %s162
      %s177 = sphi 0, %s163
      %s183 = sphi 0, %s185
      %s186 = sphi 0, %s183
      %s187 = sphi 0, %s186
      %s203 = sphi 0, %s187
    $region4: #{tpu_custom_call.1} parent=1 // loop_header_branch
      %24 = sbr.rel (%p22) target = $region8
    $region5: #{tpu_custom_call.1} parent=1 // loop_body
      %s26 = ssub.s32 %s21, 1
      %s27 = ssub.s32 %s21, 2
      %s28 = sadd.s32 %s21, 1
      %s29 = ssub.s32 %s21, %s28
      %p30 = scmp.eq.s32.totalorder %s29, 0
      %s32 = sadd.s32 %s31, 1
      %s33 = scalar_select %p30, %s31, %s32
      %p36 = pneg %p30
      %p37 = scmp.eq.s32.totalorder %s21, 1
      %p38 = por %p36, %p37
      %p39 = scmp.ne.s32.totalorder %s31, %s34
      %p40 = scmp.eq.s32.totalorder %s21, 0
      %p41 = por %p39, %p40
      %p42 = scmp.ne.s32.totalorder %s31, %s34
      %p43 = scmp.eq.s32.totalorder %s26, 1
      %p44 = por %p42, %p43
      %p45 = scmp.ne.s32.totalorder %s34, %s35
      %p46 = scmp.eq.s32.totalorder %s26, 0
      %p47 = por %p45, %p46
      %p48 = scmp.ne.s32.totalorder %s34, %s35
      %p49 = scmp.eq.s32.totalorder %s27, 1
      %p50 = por %p48, %p49
      %p52 = scmp.ne.s32.totalorder %s35, %s51
      %p53 = scmp.eq.s32.totalorder %s27, 0
      %p54 = por %p52, %p53
      %s56 = sadd.s32 %s55, 1
      %p59 = scmp.eq.s32.totalorder %s21, 1
      %p60 = scmp.ne.s32.totalorder %s55, %s57
      %p61 = scmp.eq.s32.totalorder %s21, 0
      %p62 = por %p60, %p61
      %p63 = scmp.ne.s32.totalorder %s55, %s57
      %p64 = scmp.eq.s32.totalorder %s26, 1
      %p65 = por %p63, %p64
      %p66 = scmp.ne.s32.totalorder %s57, %s58
      %p67 = scmp.eq.s32.totalorder %s26, 0
      %p68 = por %p66, %p67
      %p69 = scmp.ne.s32.totalorder %s57, %s58
      %p70 = scmp.eq.s32.totalorder %s27, 1
      %p71 = por %p69, %p70
      %p73 = scmp.ne.s32.totalorder %s58, %s72
      %p74 = scmp.eq.s32.totalorder %s27, 0
      %p75 = por %p73, %p74
      %s77 = sadd.s32 %s76, 1
      %p80 = scmp.eq.s32.totalorder %s21, 1
      %p81 = scmp.ne.s32.totalorder %s76, %s78
      %p82 = scmp.eq.s32.totalorder %s21, 0
      %p83 = por %p81, %p82
      %p84 = scmp.ne.s32.totalorder %s76, %s78
      %p85 = scmp.eq.s32.totalorder %s26, 1
      %p86 = por %p84, %p85
      %p87 = scmp.ne.s32.totalorder %s78, %s79
      %p88 = scmp.eq.s32.totalorder %s26, 0
      %p89 = por %p87, %p88
      %p90 = scmp.ne.s32.totalorder %s78, %s79
      %p91 = scmp.eq.s32.totalorder %s27, 1
      %p92 = por %p90, %p91
      %p94 = scmp.ne.s32.totalorder %s79, %s93
      %p95 = scmp.eq.s32.totalorder %s27, 0
      %p96 = por %p94, %p95
      %s98 = sadd.s32 %s97, 1
      %p101 = scmp.eq.s32.totalorder %s21, 1
      %p102 = scmp.ne.s32.totalorder %s97, %s99
      %p103 = scmp.eq.s32.totalorder %s21, 0
      %p104 = por %p102, %p103
      %p105 = scmp.ne.s32.totalorder %s97, %s99
      %p106 = scmp.eq.s32.totalorder %s26, 1
      %p107 = por %p105, %p106
      %p108 = scmp.ne.s32.totalorder %s99, %s100
      %p109 = scmp.eq.s32.totalorder %s26, 0
      %p110 = por %p108, %p109
      %p111 = scmp.ne.s32.totalorder %s99, %s100
      %p112 = scmp.eq.s32.totalorder %s27, 1
      %p113 = por %p111, %p112
      %p115 = scmp.ne.s32.totalorder %s100, %s114
      %p116 = scmp.eq.s32.totalorder %s27, 0
      %p117 = por %p115, %p116
      %s119 = sadd.s32 %s118, 1
      %p122 = scmp.eq.s32.totalorder %s21, 1
      %p123 = scmp.ne.s32.totalorder %s118, %s120
      %p124 = scmp.eq.s32.totalorder %s21, 0
      %p125 = por %p123, %p124
      %p126 = scmp.ne.s32.totalorder %s118, %s120
      %p127 = scmp.eq.s32.totalorder %s26, 1
      %p128 = por %p126, %p127
      %p129 = scmp.ne.s32.totalorder %s120, %s121
      %p130 = scmp.eq.s32.totalorder %s26, 0
      %p131 = por %p129, %p130
      %p132 = scmp.ne.s32.totalorder %s120, %s121
      %p133 = scmp.eq.s32.totalorder %s27, 1
      %p134 = por %p132, %p133
      %p136 = scmp.ne.s32.totalorder %s121, %s135
      %p137 = scmp.eq.s32.totalorder %s27, 0
      %p138 = por %p136, %p137
      %s140 = sadd.s32 %s139, 1
      %p143 = scmp.eq.s32.totalorder %s21, 1
      %p144 = scmp.ne.s32.totalorder %s139, %s141
      %p145 = scmp.eq.s32.totalorder %s21, 0
      %p146 = por %p144, %p145
      %p147 = scmp.ne.s32.totalorder %s139, %s141
      %p148 = scmp.eq.s32.totalorder %s26, 1
      %p149 = por %p147, %p148
      %p150 = scmp.ne.s32.totalorder %s141, %s142
      %p151 = scmp.eq.s32.totalorder %s26, 0
      %p152 = por %p150, %p151
      %p153 = scmp.ne.s32.totalorder %s141, %s142
      %p154 = scmp.eq.s32.totalorder %s27, 1
      %p155 = por %p153, %p154
      %p157 = scmp.ne.s32.totalorder %s142, %s156
      %p158 = scmp.eq.s32.totalorder %s27, 0
      %p159 = por %p157, %p158
      %s161 = sadd.s32 %s160, 1
      %p164 = scmp.eq.s32.totalorder %s21, 1
      %p165 = scmp.ne.s32.totalorder %s160, %s162
      %p166 = scmp.eq.s32.totalorder %s21, 0
      %p167 = por %p165, %p166
      %p168 = scmp.ne.s32.totalorder %s160, %s162
      %p169 = scmp.eq.s32.totalorder %s26, 1
      %p170 = por %p168, %p169
      %p171 = scmp.ne.s32.totalorder %s162, %s163
      %p172 = scmp.eq.s32.totalorder %s26, 0
      %p173 = por %p171, %p172
      %p174 = scmp.ne.s32.totalorder %s162, %s163
      %p175 = scmp.eq.s32.totalorder %s27, 1
      %p176 = por %p174, %p175
      %p178 = scmp.ne.s32.totalorder %s163, %s177
      %p179 = scmp.eq.s32.totalorder %s27, 0
      %p180 = por %p178, %p179
      %s181 = ssub.s32 %s21, %s28
      %p182 = scmp.eq.s32.totalorder %s181, 0
      %s184 = sadd.s32 %s183, 1
      %s185 = scalar_select %p182, %s183, %s184
      %p188 = pneg %p182
      %p189 = scmp.eq.s32.totalorder %s21, 1
      %p190 = por %p188, %p189
      %p191 = scmp.ne.s32.totalorder %s183, %s186
      %p192 = scmp.eq.s32.totalorder %s21, 0
      %p193 = por %p191, %p192
      %p194 = scmp.ne.s32.totalorder %s183, %s186
      %p195 = scmp.eq.s32.totalorder %s26, 1
      %p196 = por %p194, %p195
      %p197 = scmp.ne.s32.totalorder %s186, %s187
      %p198 = scmp.eq.s32.totalorder %s26, 0
      %p199 = por %p197, %p198
      %p200 = scmp.ne.s32.totalorder %s186, %s187
      %p201 = scmp.eq.s32.totalorder %s27, 1
      %p202 = por %p200, %p201
      %p204 = scmp.ne.s32.totalorder %s187, %s203
      %p205 = scmp.eq.s32.totalorder %s27, 0
      %p206 = por %p204, %p205
      %p207 = scmp.le.s32.totalorder 1, %s21
      %p208 = scmp.lt.s32.totalorder %s21, 3
      %p209 = pnand %p207, %p208
      %p210 = pneg %p209
      // Predicated region
      $region9: #{tpu_custom_call.1} parent=5 // pred_check
        _
      $region10: #{tpu_custom_call.1} parent=5 // pred_check_branch
        %212 = sbr.rel (%p209) target = $region12
      $region11: #{tpu_custom_call.1} parent=5 // pred_region
        %s213 = ssub.s32 %s21, 1
        // Predicated region
        $region13: #{tpu_custom_call.1} parent=11 // pred_check
          %p214 = pneg %p68
        $region14: #{tpu_custom_call.1} parent=11 // pred_check_branch
          %216 = sbr.rel (%p214) target = $region16
        $region15: #{tpu_custom_call.1} parent=11 // pred_region
          %s218 = ssub.s32 1024, 1024
          %219 = vsyncadd [#allocation6], %s218
          %s220 = sshll.u32 [#allocation5], 4
          %s221 = int_to_ptr.vmem [resolvable:$true] %s220
          %226 = dma.hbm_to_vmem [thread:$0]  %s1, 1024, %s221, [#allocation6], 64, 64, 4
        $region16: #{tpu_custom_call.1} parent=11 // pred_fallthru
          _
        // Predicated region
        $region17: #{tpu_custom_call.1} parent=11 // pred_check
          %p227 = pneg %p89
        $region18: #{tpu_custom_call.1} parent=11 // pred_check_branch
          %229 = sbr.rel (%p227) target = $region20
        $region19: #{tpu_custom_call.1} parent=11 // pred_region
          _
        $region20: #{tpu_custom_call.1} parent=11 // pred_fallthru
          _
        // Predicated region
        $region21: #{tpu_custom_call.1} parent=11 // pred_check
          %p230 = pneg %p110
        $region22: #{tpu_custom_call.1} parent=11 // pred_check_branch
          %232 = sbr.rel (%p230) target = $region24
        $region23: #{tpu_custom_call.1} parent=11 // pred_region
          %s234 = ssub.s32 1024, 1024
          %235 = vsyncadd [#allocation6], %s234
          %s236 = sshll.u32 [#allocation7], 4
          %s237 = int_to_ptr.vmem [resolvable:$true] %s236
          %242 = dma.hbm_to_vmem [thread:$0]  %s3, 1024, %s237, [#allocation6], 64, 64, 4
        $region24: #{tpu_custom_call.1} parent=11 // pred_fallthru
          _
        // Predicated region
        $region25: #{tpu_custom_call.1} parent=11 // pred_check
          %p243 = pneg %p131
        $region26: #{tpu_custom_call.1} parent=11 // pred_check_branch
          %245 = sbr.rel (%p243) target = $region28
        $region27: #{tpu_custom_call.1} parent=11 // pred_region
          _
        $region28: #{tpu_custom_call.1} parent=11 // pred_fallthru
          _
        // Predicated region
        $region29: #{tpu_custom_call.1} parent=11 // pred_check
          %p246 = pneg %p152
        $region30: #{tpu_custom_call.1} parent=11 // pred_check_branch
          %248 = sbr.rel (%p246) target = $region32
        $region31: #{tpu_custom_call.1} parent=11 // pred_region
          %s250 = ssub.s32 1024, 1024
          %251 = vsyncadd [#allocation9], %s250
          %s252 = sshll.u32 [#allocation8], 4
          %s253 = int_to_ptr.vmem [resolvable:$true] %s252
          %258 = dma.hbm_to_vmem [thread:$0]  %s5, 1024, %s253, [#allocation9], 64, 64, 4
        $region32: #{tpu_custom_call.1} parent=11 // pred_fallthru
          _
        // Predicated region
        $region33: #{tpu_custom_call.1} parent=11 // pred_check
          %p259 = pneg %p173
        $region34: #{tpu_custom_call.1} parent=11 // pred_check_branch
          %261 = sbr.rel (%p259) target = $region36
        $region35: #{tpu_custom_call.1} parent=11 // pred_region
          _
        $region36: #{tpu_custom_call.1} parent=11 // pred_fallthru
          _
      $region12: #{tpu_custom_call.1} parent=5 // pred_fallthru
        _
      %p262 = scmp.lt.s32.totalorder %s21, 2
      // Predicated region
      $region37: #{tpu_custom_call.1} parent=5 // pred_check
        %p263 = pneg %p262
      $region38: #{tpu_custom_call.1} parent=5 // pred_check_branch
        %265 = sbr.rel (%p263) target = $region40
      $region39: #{tpu_custom_call.1} parent=5 // pred_region
        // Predicated region
        $region41: #{tpu_custom_call.1} parent=39 // pred_check
          %p266 = pneg %p41
        $region42: #{tpu_custom_call.1} parent=39 // pred_check_branch
          %268 = sbr.rel (%p266) target = $region44
        $region43: #{tpu_custom_call.1} parent=39 // pred_region
          %s269 = sand.u32 %s31, 1
          %s270 = scalar_lea.sflag [#allocation3], %s269
          %s271 = sand.u32 %s31, 1
          %s272 = smul.addr %s271, 8
          %s273 = scalar_lea.vmem [#allocation2], %s272
          %s275 = ssub.s32 128, 128
          %276 = vsyncadd %s270, %s275
          %s277 = smul.addr %s21, 128
          %s278 = scalar_lea.hbm %s0, %s277
          %s280 = sshll.u32 %s273, 4
          %s281 = int_to_ptr.vmem [resolvable:$true] %s280
          %283 = dma.hbm_to_vmem [thread:$0]  %s278, 128, %s281, %s270
        $region44: #{tpu_custom_call.1} parent=39 // pred_fallthru
          _
      $region40: #{tpu_custom_call.1} parent=5 // pred_fallthru
        _
      %p284 = scmp.le.s32.totalorder 1, %s21
      %p285 = scmp.lt.s32.totalorder %s21, 3
      %p286 = pnand %p284, %p285
      %p287 = pneg %p286
      // Predicated region
      $region45: #{tpu_custom_call.1} parent=5 // pred_check
        _
      $region46: #{tpu_custom_call.1} parent=5 // pred_check_branch
        %289 = sbr.rel (%p286) target = $region48
      $region47: #{tpu_custom_call.1} parent=5 // pred_region
        %s290 = ssub.s32 %s21, 1
        %s291 = sand.u32 %s34, 1
        %s292 = scalar_lea.sflag [#allocation3], %s291
        %s293 = sand.u32 %s34, 1
        %s294 = smul.addr %s293, 8
        %s295 = scalar_lea.vmem [#allocation2], %s294
        // Predicated region
        $region49: #{tpu_custom_call.1} parent=47 // pred_check
          %p296 = pneg %p47
        $region50: #{tpu_custom_call.1} parent=47 // pred_check_branch
          %298 = sbr.rel (%p296) target = $region52
        $region51: #{tpu_custom_call.1} parent=47 // pred_region
          %299 = dma.done %s292, 128
        $region52: #{tpu_custom_call.1} parent=47 // pred_fallthru
          _
        // Predicated region
        $region53: #{tpu_custom_call.1} parent=47 // pred_check
          %p300 = pneg %p68
        $region54: #{tpu_custom_call.1} parent=47 // pred_check_branch
          %302 = sbr.rel (%p300) target = $region56
        $region55: #{tpu_custom_call.1} parent=47 // pred_region
          %303 = dma.done [#allocation6], 1024
        $region56: #{tpu_custom_call.1} parent=47 // pred_fallthru
          _
        // Predicated region
        $region57: #{tpu_custom_call.1} parent=47 // pred_check
          %p304 = pneg %p110
        $region58: #{tpu_custom_call.1} parent=47 // pred_check_branch
          %306 = sbr.rel (%p304) target = $region60
        $region59: #{tpu_custom_call.1} parent=47 // pred_region
          %307 = dma.done [#allocation6], 1024
        $region60: #{tpu_custom_call.1} parent=47 // pred_fallthru
          _
        // Predicated region
        $region61: #{tpu_custom_call.1} parent=47 // pred_check
          %p308 = pneg %p152
        $region62: #{tpu_custom_call.1} parent=47 // pred_check_branch
          %310 = sbr.rel (%p308) target = $region64
        $region63: #{tpu_custom_call.1} parent=47 // pred_region
          %311 = dma.done [#allocation9], 1024
        $region64: #{tpu_custom_call.1} parent=47 // pred_fallthru
          _
        %s312 = sand.u32 %s34, 1
        %s313 = scalar_lea.sflag [#allocation3], %s312
        %s314 = sand.u32 %s34, 1
        %s315 = smul.addr %s314, 8
        %s316 = scalar_lea.vmem [#allocation2], %s315
        %p317 = pneg %p47
        %p318 = pneg %p44
        %p319 = pneg %p68
        %p320 = pneg %p65
        %p321 = pneg %p89
        %p322 = pneg %p86
        %p323 = pneg %p110
        %p324 = pneg %p107
        %p325 = pneg %p131
        %p326 = pneg %p128
        %p327 = pneg %p152
        %p328 = pneg %p149
        %p329 = pneg %p173
        %p330 = pneg %p170
        %p331 = pneg %p199
        %p332 = pneg %p196
        %s333 = sand.u32 %s186, 1
        %s334 = scalar_lea.sflag [#allocation4], %s333
        %s335 = sand.u32 %s186, 1
        %s336 = smul.addr %s335, 8
        %s337 = scalar_lea.vmem [#allocation10], %s336
        %v339 = vld [vmem:[%s295] sm:$0xff]
        %v340 = vpack.c.bf16 %v339, %v339
        %v341 = vld [vmem:[#allocation5] sm:$0xf]
        %v342 = vld [vmem:[#allocation5 + $0x4] sm:$0xf]
        %v343 = vld [vmem:[#allocation5 + $0x8] sm:$0xf]
        %v344 = vld [vmem:[#allocation5 + $0xc] sm:$0xf]
        %v345 = vld [vmem:[#allocation5 + $0x10] sm:$0xf]
        %v346 = vld [vmem:[#allocation5 + $0x14] sm:$0xf]
        %v347 = vld [vmem:[#allocation5 + $0x18] sm:$0xf]
        %v348 = vld [vmem:[#allocation5 + $0x1c] sm:$0xf]
        %v349 = vld [vmem:[#allocation5 + $0x20] sm:$0xf]
        %v350 = vld [vmem:[#allocation5 + $0x24] sm:$0xf]
        %v351 = vld [vmem:[#allocation5 + $0x28] sm:$0xf]
        %v352 = vld [vmem:[#allocation5 + $0x2c] sm:$0xf]
        %v353 = vld [vmem:[#allocation5 + $0x30] sm:$0xf]
        %v354 = vld [vmem:[#allocation5 + $0x34] sm:$0xf]
        %v355 = vld [vmem:[#allocation5 + $0x38] sm:$0xf]
        %v356 = vld [vmem:[#allocation5 + $0x3c] sm:$0xf]
        %v357 = vld [vmem:[%s2] sm:$0x1]
        %v359 = vlaneseq
        %v360 = vshrl.u32 %v359, 7
        %v361 = vsub.s32 0, %v360
        %v362 = vrot.slane %v357, %v361
        %v380 = vunpack.c.l.b16 %v341
        %v381 = vunpack.c.l.b16 %v342
        %v382 = vunpack.c.l.b16 %v343
        %v383 = vunpack.c.l.b16 %v344
        %v384 = vunpack.c.l.b16 %v345
        %v385 = vunpack.c.l.b16 %v346
        %v386 = vunpack.c.l.b16 %v347
        %v387 = vunpack.c.l.b16 %v348
        %v388 = vunpack.c.l.b16 %v349
        %v389 = vunpack.c.l.b16 %v350
        %v390 = vunpack.c.l.b16 %v351
        %v391 = vunpack.c.l.b16 %v352
        %v392 = vunpack.c.l.b16 %v353
        %v393 = vunpack.c.l.b16 %v354
        %v394 = vunpack.c.l.b16 %v355
        %v395 = vunpack.c.l.b16 %v356
        %v396 = vpack.c.b16 %v381, %v380
        %v397 = vpack.c.b16 %v383, %v382
        %v398 = vpack.c.b16 %v385, %v384
        %v399 = vpack.c.b16 %v387, %v386
        %v400 = vpack.c.b16 %v389, %v388
        %v401 = vpack.c.b16 %v391, %v390
        %v402 = vpack.c.b16 %v393, %v392
        %v403 = vpack.c.b16 %v395, %v394
        %412 = vmatprep.subr.bf16.mxu0 0
        %413 = vmatpush1.bf16.msra.mxu0 %v396
        %414 = vmatprep.subr.bf16.mxu0 0
        %415 = vmatpush1.bf16.msra.mxu0 %v397
        %416 = vmatprep.subr.bf16.mxu0 0
        %417 = vmatpush1.bf16.msra.mxu0 %v398
        %418 = vmatprep.subr.bf16.mxu0 0
        %419 = vmatpush1.bf16.msra.mxu0 %v399
        %420 = vmatprep.subr.bf16.mxu0 0
        %421 = vmatpush1.bf16.msra.mxu0 %v400
        %422 = vmatprep.subr.bf16.mxu0 0
        %423 = vmatpush1.bf16.msra.mxu0 %v401
        %424 = vmatprep.subr.bf16.mxu0 0
        %425 = vmatpush1.bf16.msra.mxu0 %v402
        %426 = vmatprep.subr.bf16.mxu0 0
        %427 = vmatpush1.bf16.msra.mxu0 %v403
        %428 = vmatprep.subr.bf16.mxu0 0
        %429 = vmatpush1.bf16.msra.mxu0 0
        %430 = vmatprep.subr.bf16.mxu0 0
        %431 = vmatpush1.bf16.msra.mxu0 0
        %432 = vmatprep.subr.bf16.mxu0 0
        %433 = vmatpush1.bf16.msra.mxu0 0
        %434 = vmatprep.subr.bf16.mxu0 0
        %435 = vmatpush1.bf16.msra.mxu0 0
        %436 = vmatprep.subr.bf16.mxu0 0
        %437 = vmatpush1.bf16.msra.mxu0 0
        %438 = vmatprep.subr.bf16.mxu0 0
        %439 = vmatpush1.bf16.msra.mxu0 0
        %440 = vmatprep.subr.bf16.mxu0 0
        %441 = vmatpush1.bf16.msra.mxu0 0
        %442 = vmatprep.subr.bf16.mxu0 0
        %443 = vmatpush1.bf16.msra.mxu0 0
        %444 = vmatprep.mubr.bf16.mxu0 0
        %445 = vmatmul.mubr.bf16.gmra.mrb[0].mxu0 %v340
        %v446 = vpop.f32.mrb[0].mxu0
        %v447 = vadd.f32 %v362, %v446
        %v448 = vpop.f32.mrb[0].mxu0
        %v449 = vpop.f32.mrb[0].mxu0
        %v450 = vpop.f32.mrb[0].mxu0
        %451 = vdwg.mxu0
        %v452 = vmax.f32 %v447, 0.0
        %v453 = vpack.c.bf16 %v452, %v452
        %v454 = vld [vmem:[#allocation7] sm:$0xf]
        %v455 = vld [vmem:[#allocation7 + $0x4] sm:$0xf]
        %v456 = vld [vmem:[#allocation7 + $0x8] sm:$0xf]
        %v457 = vld [vmem:[#allocation7 + $0xc] sm:$0xf]
        %v458 = vld [vmem:[#allocation7 + $0x10] sm:$0xf]
        %v459 = vld [vmem:[#allocation7 + $0x14] sm:$0xf]
        %v460 = vld [vmem:[#allocation7 + $0x18] sm:$0xf]
        %v461 = vld [vmem:[#allocation7 + $0x1c] sm:$0xf]
        %v462 = vld [vmem:[#allocation7 + $0x20] sm:$0xf]
        %v463 = vld [vmem:[#allocation7 + $0x24] sm:$0xf]
        %v464 = vld [vmem:[#allocation7 + $0x28] sm:$0xf]
        %v465 = vld [vmem:[#allocation7 + $0x2c] sm:$0xf]
        %v466 = vld [vmem:[#allocation7 + $0x30] sm:$0xf]
        %v467 = vld [vmem:[#allocation7 + $0x34] sm:$0xf]
        %v468 = vld [vmem:[#allocation7 + $0x38] sm:$0xf]
        %v469 = vld [vmem:[#allocation7 + $0x3c] sm:$0xf]
        %v470 = vld [vmem:[%s4] sm:$0x1]
        %v472 = vlaneseq
        %v473 = vshrl.u32 %v472, 7
        %v474 = vsub.s32 0, %v473
        %v475 = vrot.slane %v470, %v474
        %v493 = vunpack.c.l.b16 %v454
        %v494 = vunpack.c.l.b16 %v455
        %v495 = vunpack.c.l.b16 %v456
        %v496 = vunpack.c.l.b16 %v457
        %v497 = vunpack.c.l.b16 %v458
        %v498 = vunpack.c.l.b16 %v459
        %v499 = vunpack.c.l.b16 %v460
        %v500 = vunpack.c.l.b16 %v461
        %v501 = vunpack.c.l.b16 %v462
        %v502 = vunpack.c.l.b16 %v463
        %v503 = vunpack.c.l.b16 %v464
        %v504 = vunpack.c.l.b16 %v465
        %v505 = vunpack.c.l.b16 %v466
        %v506 = vunpack.c.l.b16 %v467
        %v507 = vunpack.c.l.b16 %v468
        %v508 = vunpack.c.l.b16 %v469
        %v509 = vpack.c.b16 %v494, %v493
        %v510 = vpack.c.b16 %v496, %v495
        %v511 = vpack.c.b16 %v498, %v497
        %v512 = vpack.c.b16 %v500, %v499
        %v513 = vpack.c.b16 %v502, %v501
        %v514 = vpack.c.b16 %v504, %v503
        %v515 = vpack.c.b16 %v506, %v505
        %v516 = vpack.c.b16 %v508, %v507
        %525 = vmatprep.subr.bf16.mxu0 0
        %526 = vmatpush1.bf16.msra.mxu0 %v509
        %527 = vmatprep.subr.bf16.mxu0 0
        %528 = vmatpush1.bf16.msra.mxu0 %v510
        %529 = vmatprep.subr.bf16.mxu0 0
        %530 = vmatpush1.bf16.msra.mxu0 %v511
        %531 = vmatprep.subr.bf16.mxu0 0
        %532 = vmatpush1.bf16.msra.mxu0 %v512
        %533 = vmatprep.subr.bf16.mxu0 0
        %534 = vmatpush1.bf16.msra.mxu0 %v513
        %535 = vmatprep.subr.bf16.mxu0 0
        %536 = vmatpush1.bf16.msra.mxu0 %v514
        %537 = vmatprep.subr.bf16.mxu0 0
        %538 = vmatpush1.bf16.msra.mxu0 %v515
        %539 = vmatprep.subr.bf16.mxu0 0
        %540 = vmatpush1.bf16.msra.mxu0 %v516
        %541 = vmatprep.subr.bf16.mxu0 0
        %542 = vmatpush1.bf16.msra.mxu0 0
        %543 = vmatprep.subr.bf16.mxu0 0
        %544 = vmatpush1.bf16.msra.mxu0 0
        %545 = vmatprep.subr.bf16.mxu0 0
        %546 = vmatpush1.bf16.msra.mxu0 0
        %547 = vmatprep.subr.bf16.mxu0 0
        %548 = vmatpush1.bf16.msra.mxu0 0
        %549 = vmatprep.subr.bf16.mxu0 0
        %550 = vmatpush1.bf16.msra.mxu0 0
        %551 = vmatprep.subr.bf16.mxu0 0
        %552 = vmatpush1.bf16.msra.mxu0 0
        %553 = vmatprep.subr.bf16.mxu0 0
        %554 = vmatpush1.bf16.msra.mxu0 0
        %555 = vmatprep.subr.bf16.mxu0 0
        %556 = vmatpush1.bf16.msra.mxu0 0
        %557 = vmatprep.mubr.bf16.mxu0 0
        %558 = vmatmul.mubr.bf16.gmra.mrb[0].mxu0 %v453
        %v559 = vpop.f32.mrb[0].mxu0
        %v560 = vadd.f32 %v475, %v559
        %v561 = vpop.f32.mrb[0].mxu0
        %v562 = vpop.f32.mrb[0].mxu0
        %v563 = vpop.f32.mrb[0].mxu0
        %564 = vdwg.mxu0
        %v565 = vmax.f32 %v560, 0.0
        %v566 = vpack.c.bf16 %v565, %v565
        %v567 = vld [vmem:[#allocation8] sm:$0xf]
        %v568 = vld [vmem:[#allocation8 + $0x4] sm:$0xf]
        %v569 = vld [vmem:[#allocation8 + $0x8] sm:$0xf]
        %v570 = vld [vmem:[#allocation8 + $0xc] sm:$0xf]
        %v571 = vld [vmem:[#allocation8 + $0x10] sm:$0xf]
        %v572 = vld [vmem:[#allocation8 + $0x14] sm:$0xf]
        %v573 = vld [vmem:[#allocation8 + $0x18] sm:$0xf]
        %v574 = vld [vmem:[#allocation8 + $0x1c] sm:$0xf]
        %v575 = vld [vmem:[#allocation8 + $0x20] sm:$0xf]
        %v576 = vld [vmem:[#allocation8 + $0x24] sm:$0xf]
        %v577 = vld [vmem:[#allocation8 + $0x28] sm:$0xf]
        %v578 = vld [vmem:[#allocation8 + $0x2c] sm:$0xf]
        %v579 = vld [vmem:[#allocation8 + $0x30] sm:$0xf]
        %v580 = vld [vmem:[#allocation8 + $0x34] sm:$0xf]
        %v581 = vld [vmem:[#allocation8 + $0x38] sm:$0xf]
        %v582 = vld [vmem:[#allocation8 + $0x3c] sm:$0xf]
        %v583 = vld [vmem:[%s6] sm:$0x1]
        %v585 = vlaneseq
        %v586 = vshrl.u32 %v585, 7
        %v587 = vsub.s32 0, %v586
        %v588 = vrot.slane %v583, %v587
        %v606 = vunpack.c.l.b16 %v567
        %v607 = vunpack.c.l.b16 %v568
        %v608 = vunpack.c.l.b16 %v569
        %v609 = vunpack.c.l.b16 %v570
        %v610 = vunpack.c.l.b16 %v571
        %v611 = vunpack.c.l.b16 %v572
        %v612 = vunpack.c.l.b16 %v573
        %v613 = vunpack.c.l.b16 %v574
        %v614 = vunpack.c.l.b16 %v575
        %v615 = vunpack.c.l.b16 %v576
        %v616 = vunpack.c.l.b16 %v577
        %v617 = vunpack.c.l.b16 %v578
        %v618 = vunpack.c.l.b16 %v579
        %v619 = vunpack.c.l.b16 %v580
        %v620 = vunpack.c.l.b16 %v581
        %v621 = vunpack.c.l.b16 %v582
        %v622 = vpack.c.b16 %v607, %v606
        %v623 = vpack.c.b16 %v609, %v608
        %v624 = vpack.c.b16 %v611, %v610
        %v625 = vpack.c.b16 %v613, %v612
        %v626 = vpack.c.b16 %v615, %v614
        %v627 = vpack.c.b16 %v617, %v616
        %v628 = vpack.c.b16 %v619, %v618
        %v629 = vpack.c.b16 %v621, %v620
        %638 = vmatprep.subr.bf16.mxu0 0
        %639 = vmatpush1.bf16.msra.mxu0 %v622
        %640 = vmatprep.subr.bf16.mxu0 0
        %641 = vmatpush1.bf16.msra.mxu0 %v623
        %642 = vmatprep.subr.bf16.mxu0 0
        %643 = vmatpush1.bf16.msra.mxu0 %v624
        %644 = vmatprep.subr.bf16.mxu0 0
        %645 = vmatpush1.bf16.msra.mxu0 %v625
        %646 = vmatprep.subr.bf16.mxu0 0
        %647 = vmatpush1.bf16.msra.mxu0 %v626
        %648 = vmatprep.subr.bf16.mxu0 0
        %649 = vmatpush1.bf16.msra.mxu0 %v627
        %650 = vmatprep.subr.bf16.mxu0 0
        %651 = vmatpush1.bf16.msra.mxu0 %v628
        %652 = vmatprep.subr.bf16.mxu0 0
        %653 = vmatpush1.bf16.msra.mxu0 %v629
        %654 = vmatprep.subr.bf16.mxu0 0
        %655 = vmatpush1.bf16.msra.mxu0 0
        %656 = vmatprep.subr.bf16.mxu0 0
        %657 = vmatpush1.bf16.msra.mxu0 0
        %658 = vmatprep.subr.bf16.mxu0 0
        %659 = vmatpush1.bf16.msra.mxu0 0
        %660 = vmatprep.subr.bf16.mxu0 0
        %661 = vmatpush1.bf16.msra.mxu0 0
        %662 = vmatprep.subr.bf16.mxu0 0
        %663 = vmatpush1.bf16.msra.mxu0 0
        %664 = vmatprep.subr.bf16.mxu0 0
        %665 = vmatpush1.bf16.msra.mxu0 0
        %666 = vmatprep.subr.bf16.mxu0 0
        %667 = vmatpush1.bf16.msra.mxu0 0
        %668 = vmatprep.subr.bf16.mxu0 0
        %669 = vmatpush1.bf16.msra.mxu0 0
        %670 = vmatprep.mubr.bf16.mxu0 0
        %671 = vmatmul.mubr.bf16.gmra.mrb[0].mxu0 %v566
        %v672 = vpop.f32.mrb[0].mxu0
        %v673 = vadd.f32 %v588, %v672
        %v674 = vpop.f32.mrb[0].mxu0
        %v675 = vpop.f32.mrb[0].mxu0
        %v676 = vpop.f32.mrb[0].mxu0
        %677 = vdwg.mxu0
        %678 = vst [vmem:[%s337] sm:$0xff] %v673
        %s679 = sand.u32 %s186, 1
        %s680 = scalar_lea.sflag [#allocation4], %s679
        %s681 = sand.u32 %s186, 1
        %s682 = smul.addr %s681, 8
        %s683 = scalar_lea.vmem [#allocation10], %s682
        // Predicated region
        $region65: #{tpu_custom_call.1} parent=47 // pred_check
          %p684 = pneg %p196
        $region66: #{tpu_custom_call.1} parent=47 // pred_check_branch
          %686 = sbr.rel (%p684) target = $region68
        $region67: #{tpu_custom_call.1} parent=47 // pred_region
          %s688 = ssub.s32 128, 128
          %689 = vsyncadd %s680, %s688
          %s690 = smul.addr %s26, 128
          %s691 = scalar_lea.hbm %s7, %s690
          %s693 = sshll.u32 %s683, 4
          %s694 = int_to_ptr.vmem [resolvable:$true] %s693
          %696 = dma.vmem_to_hbm [thread:$0]  %s694, 128, %s691, %s680
        $region68: #{tpu_custom_call.1} parent=47 // pred_fallthru
          _
      $region48: #{tpu_custom_call.1} parent=5 // pred_fallthru
        _
      %p697 = scmp.le.s32.totalorder 2, %s21
      // Predicated region
      $region69: #{tpu_custom_call.1} parent=5 // pred_check
        %p698 = pneg %p697
      $region70: #{tpu_custom_call.1} parent=5 // pred_check_branch
        %700 = sbr.rel (%p698) target = $region72
      $region71: #{tpu_custom_call.1} parent=5 // pred_region
        %s701 = ssub.s32 %s21, 2
        // Predicated region
        $region73: #{tpu_custom_call.1} parent=71 // pred_check
          %p702 = pneg %p202
        $region74: #{tpu_custom_call.1} parent=71 // pred_check_branch
          %704 = sbr.rel (%p702) target = $region76
        $region75: #{tpu_custom_call.1} parent=71 // pred_region
          %s705 = sand.u32 %s187, 1
          %s706 = scalar_lea.sflag [#allocation4], %s705
          %s707 = sand.u32 %s187, 1
          %s708 = smul.addr %s707, 8
          %s709 = scalar_lea.vmem [#allocation10], %s708
          %710 = dma.done %s706, 128
        $region76: #{tpu_custom_call.1} parent=71 // pred_fallthru
          _
      $region72: #{tpu_custom_call.1} parent=5 // pred_fallthru
        _
    $region6: #{tpu_custom_call.1} parent=1 // loop_footer
      %s25 = sadd.s32 1, %s21
    $region7: #{tpu_custom_call.1} parent=1 // loop_footer_branch
      %20 = sbr.rel target = $region3
    $region8: #{tpu_custom_call.1} parent=1 // loop_exit
      _
    %711 = vsyncpa [#allocation3], 1
    %s712 = scalar_lea.sflag [#allocation3], 1
    %713 = vsyncpa %s712, 1
    %714 = vsyncpa [#allocation6], 1
    %715 = vsyncpa [#allocation9], 1
    %716 = vsyncpa [#allocation4], 1
    %s717 = scalar_lea.sflag [#allocation4], 1
    %718 = vsyncpa %s717, 1

</llo_original>
